<compile_context>
chip_gen: v7x
topology: tpu7x:2x2x1
jax: 0.10.0
libtpu: 0.0.40
codegen_flags: <defaults>
</compile_context>

<pallas_src>
import jax
import jax.numpy as jnp
from jax import lax
from jax.experimental import pallas as pl
from jax.experimental.pallas import tpu as pltpu

# ---------------- configuration (small, deterministic, shape-consistent) -------------
B = 2            # batch
S = 8            # sequence length
H = 32           # hidden size
NUM_HEADS = 2
HEAD_DIM = H // NUM_HEADS
FFN = 64         # intermediate size
NUM_LAYERS = 2
VOCAB = 64
NUM_LABELS = 5
LN_EPS = 1e-5
INIT_RANGE = 0.02
NEG_INF = -1e9
BS = B * S
LOGIT_PAD = 128  # lane-dense padded logit width (real labels = first NUM_LABELS cols)


def _layer_norm(x, w, b, eps=LN_EPS):
    mean = jnp.mean(x, axis=-1, keepdims=True)
    var = jnp.mean((x - mean) ** 2, axis=-1, keepdims=True)
    return (x - mean) * lax.rsqrt(var + eps) * w + b


# ----------------------------- fused Pallas kernel ------------------------------------
def fused_encoder_cls_kernel(
        x_emb_ref, mask_add_ref, valid_ref, labels_ref,
        wqkv_ref, bqkv_ref, wo_ref, bo_ref, ln1w_ref, ln1b_ref,
        w1_ref, b1_ref, w2_ref, b2_ref, ln2w_ref, ln2b_ref,
        clsw_ref, clsb_ref,
        loss_ref, logits_ref,
        x_sc):
    l = pl.program_id(0)

    # at layer 0, load the embeddings into the resident VMEM activation scratch
    @pl.when(l == 0)
    def _():
        x_sc[...] = x_emb_ref[...]

    x = x_sc[...]                      # [BS, H]
    mask_add = mask_add_ref[...]       # [B, 1, S] additive attention mask (precomputed)

    # ---- fused QKV projection: one [BS,H] @ [H,3H] MXU pass ----
    qkv = jnp.dot(x, wqkv_ref[0], preferred_element_type=jnp.float32) + bqkv_ref[0]

    scale = 1.0 / (HEAD_DIM ** 0.5)
    ctx_heads = []
    for h in range(NUM_HEADS):                                   # static loop over heads
        q_h = qkv[:, h * HEAD_DIM:(h + 1) * HEAD_DIM].reshape(B, S, HEAD_DIM)
        k_h = qkv[:, H + h * HEAD_DIM:H + (h + 1) * HEAD_DIM].reshape(B, S, HEAD_DIM)
        v_h = qkv[:, 2 * H + h * HEAD_DIM:2 * H + (h + 1) * HEAD_DIM].reshape(B, S, HEAD_DIM)
        scores = jnp.einsum('bqd,bkd->bqk', q_h, k_h,
                            preferred_element_type=jnp.float32) * scale
        scores = scores + mask_add                                # [B,S,S] + [B,1,S]
        scores = scores - jnp.max(scores, axis=-1, keepdims=True)
        p = jnp.exp(scores)
        p = p * pl.reciprocal(jnp.sum(p, axis=-1, keepdims=True), approx=True)
        ctx_h = jnp.einsum('bqk,bkd->bqd', p, v_h,
                           preferred_element_type=jnp.float32)    # [B,S,HD]
        ctx_heads.append(ctx_h.reshape(BS, HEAD_DIM))
    ctx = jnp.concatenate(ctx_heads, axis=-1)                     # [BS, H]

    attn_out = jnp.dot(ctx, wo_ref[0], preferred_element_type=jnp.float32) + bo_ref[0]
    h1 = _layer_norm(x + attn_out, ln1w_ref[0], ln1b_ref[0])

    ff = jnp.dot(h1, w1_ref[0], preferred_element_type=jnp.float32) + b1_ref[0]
    # TODO(synk): HF default is exact (erf) GELU; tanh approximation kept for guaranteed lowering.
    ff = jax.nn.gelu(ff, approximate=True)
    ff_out = jnp.dot(ff, w2_ref[0], preferred_element_type=jnp.float32) + b2_ref[0]
    x_new = _layer_norm(h1 + ff_out, ln2w_ref[0], ln2b_ref[0])
    x_sc[...] = x_new                                             # carried to next layer

    # ---- at the last layer: classifier + masked cross-entropy (fused) ----
    @pl.when(l == NUM_LAYERS - 1)
    def _():
        # dropout(sequence_out) is identity in eval mode
        logits = (jnp.dot(x_new, clsw_ref[...], preferred_element_type=jnp.float32)
                  + clsb_ref[...])                                # [BS, LOGIT_PAD]
        logits_ref[...] = logits                                  # lane-dense store

        col = lax.broadcasted_iota(jnp.int32, logits.shape, 1)    # [BS, LOGIT_PAD]
        logits_m = jnp.where(col < NUM_LABELS, logits, NEG_INF)   # mask padded columns
        m = jnp.max(logits_m, axis=-1, keepdims=True)
        lse = jnp.log(jnp.sum(jnp.exp(logits_m - m), axis=-1, keepdims=True)) + m
        onehot = (col == labels_ref[...]).astype(jnp.float32)     # labels < NUM_LABELS
        picked = jnp.sum(logits_m * onehot, axis=-1, keepdims=True)
        nll = lse - picked                                        # [BS, 1]
        valid = valid_ref[...]                                    # [BS, 1], 1.0 = active
        total = jnp.sum(nll * valid)
        count = jnp.maximum(jnp.sum(valid), 1.0)                  # guard fully-padded batch
        loss_ref[0, 0] = total / count


# ----------------------------- Pallas wrapper ------------------------------------------
def run_model_kernel(x_emb, mask_add, valid, labels, params, cls_w_pad, cls_b_pad):
    weight_order = ["wqkv", "bqkv", "wo", "bo", "ln1_w", "ln1_b",
                    "w1", "b1", "w2", "b2", "ln2_w", "ln2_b"]
    weights = [params[n] for n in weight_order]                   # each stacked [L, ...]
    weight_specs = [pl.BlockSpec((1,) + w.shape[1:], lambda l: (l, 0, 0)) for w in weights]

    in_specs = [
        pl.BlockSpec((BS, H), lambda l: (0, 0)),                  # embeddings (invariant)
        pl.BlockSpec((B, 1, S), lambda l: (0, 0, 0)),             # additive mask
        pl.BlockSpec((BS, 1), lambda l: (0, 0)),                  # valid mask
        pl.BlockSpec((BS, 1), lambda l: (0, 0)),                  # labels
    ] + weight_specs + [
        pl.BlockSpec((H, LOGIT_PAD), lambda l: (0, 0)),           # padded classifier W
        pl.BlockSpec((1, LOGIT_PAD), lambda l: (0, 0)),           # padded classifier b
    ]
    out_specs = [
        pl.BlockSpec(memory_space=pltpu.MemorySpace.SMEM),        # scalar loss
        pl.BlockSpec((BS, LOGIT_PAD), lambda l: (0, 0)),          # lane-dense logits
    ]
    out_shape = (jax.ShapeDtypeStruct((1, 1), jnp.float32),
                 jax.ShapeDtypeStruct((BS, LOGIT_PAD), jnp.float32))

    loss, logits_pad = pl.pallas_call(
        fused_encoder_cls_kernel,
        grid=(NUM_LAYERS,),
        in_specs=in_specs,
        out_specs=out_specs,
        out_shape=out_shape,
        scratch_shapes=[pltpu.VMEM((BS, H), jnp.float32)],        # resident activation
        compiler_params=pltpu.CompilerParams(dimension_semantics=("arbitrary",)),
    )(x_emb, mask_add, valid, labels, *weights, cls_w_pad, cls_b_pad)
    return loss, logits_pad


# ----------------------------- parameter initialization -------------------------------
def init_params(key):
    def normal(k, shape):
        return jax.random.normal(k, shape, jnp.float32) * INIT_RANGE

    keys = jax.random.split(key, 8)
    params = {
        "word_emb": normal(keys[0], (VOCAB, H)),
        "pos_emb": normal(keys[1], (S, H)),
        "emb_ln_w": jnp.ones((1, H), jnp.float32),
        "emb_ln_b": jnp.zeros((1, H), jnp.float32),
        # classifier: Linear(H, NUM_LABELS), weight ~ N(0, initializer_range), bias = 0
        "cls_w": normal(keys[2], (H, NUM_LABELS)),
        "cls_b": jnp.zeros((1, NUM_LABELS), jnp.float32),
        # stacked per-layer encoder weights [NUM_LAYERS, ...] (QKV fused into [H, 3H])
        "wqkv": normal(keys[3], (NUM_LAYERS, H, 3 * H)),
        "bqkv": jnp.zeros((NUM_LAYERS, 1, 3 * H), jnp.float32),
        "wo": normal(keys[4], (NUM_LAYERS, H, H)),
        "bo": jnp.zeros((NUM_LAYERS, 1, H), jnp.float32),
        "ln1_w": jnp.ones((NUM_LAYERS, 1, H), jnp.float32),
        "ln1_b": jnp.zeros((NUM_LAYERS, 1, H), jnp.float32),
        "w1": normal(keys[5], (NUM_LAYERS, H, FFN)),
        "b1": jnp.zeros((NUM_LAYERS, 1, FFN), jnp.float32),
        "w2": normal(keys[6], (NUM_LAYERS, FFN, H)),
        "b2": jnp.zeros((NUM_LAYERS, 1, H), jnp.float32),
        "ln2_w": jnp.ones((NUM_LAYERS, 1, H), jnp.float32),
        "ln2_b": jnp.zeros((NUM_LAYERS, 1, H), jnp.float32),
    }
    return params


# ----------------------------- full forward pass ---------------------------------------
def forward(params, input_ids, attention_mask, labels):
    # embeddings (glue: gather + LayerNorm in plain JAX)
    x = params["word_emb"][input_ids] + params["pos_emb"][None, :, :]      # [B, S, H]
    x = _layer_norm(x, params["emb_ln_w"][None], params["emb_ln_b"][None])
    x_emb = x.reshape(BS, H)

    mask_f = attention_mask.astype(jnp.float32)
    mask_add = ((1.0 - mask_f) * NEG_INF).reshape(B, 1, S)   # additive attn mask, once
    valid = mask_f.reshape(BS, 1)
    lab = labels.reshape(BS, 1).astype(jnp.int32)

    # pad classifier weights to a lane-dense 128-wide output
    cls_w_pad = jnp.pad(params["cls_w"], ((0, 0), (0, LOGIT_PAD - NUM_LABELS)))
    cls_b_pad = jnp.pad(params["cls_b"], ((0, 0), (0, LOGIT_PAD - NUM_LABELS)))

    loss, logits_pad = run_model_kernel(x_emb, mask_add, valid, lab,
                                        params, cls_w_pad, cls_b_pad)
    logits = logits_pad[:, :NUM_LABELS].reshape(B, S, NUM_LABELS)
    return loss[0, 0], logits


if __name__ == "__main__":
    key = jax.random.PRNGKey(0)
    k_param, k_ids, k_lab = jax.random.split(key, 3)

    params = init_params(k_param)
    input_ids = jax.random.randint(k_ids, (B, S), 0, VOCAB, dtype=jnp.int32)
    attention_mask = jnp.array([[1, 1, 1, 1, 1, 1, 1, 1],
                                [1, 1, 1, 1, 1, 0, 0, 0]], dtype=jnp.int32)
    labels = jax.random.randint(k_lab, (B, S), 0, NUM_LABELS, dtype=jnp.int32)

    fwd = jax.jit(forward)
    loss, logits = fwd(params, input_ids, attention_mask, labels)
    loss = jax.block_until_ready(loss)
    logits = jax.block_until_ready(logits)

    assert logits.shape == (B, S, NUM_LABELS)
    assert bool(jnp.isfinite(loss))
    print("KERNEL_OK")
</pallas_src>

<mosaic_0001>
module attributes {stable_mosaic.version = 11 : i64} {
  func.func @fused_encoder_cls_kernel(%arg0: i32, %arg1: memref<16x32xf32, #tpu.memory_space<vmem>>, %arg2: memref<2x1x8xf32, #tpu.memory_space<vmem>>, %arg3: memref<16x1xf32, #tpu.memory_space<vmem>>, %arg4: memref<16x1xi32, #tpu.memory_space<vmem>>, %arg5: memref<1x32x96xf32, #tpu.memory_space<vmem>>, %arg6: memref<1x1x96xf32, #tpu.memory_space<vmem>>, %arg7: memref<1x32x32xf32, #tpu.memory_space<vmem>>, %arg8: memref<1x1x32xf32, #tpu.memory_space<vmem>>, %arg9: memref<1x1x32xf32, #tpu.memory_space<vmem>>, %arg10: memref<1x1x32xf32, #tpu.memory_space<vmem>>, %arg11: memref<1x32x64xf32, #tpu.memory_space<vmem>>, %arg12: memref<1x1x64xf32, #tpu.memory_space<vmem>>, %arg13: memref<1x64x32xf32, #tpu.memory_space<vmem>>, %arg14: memref<1x1x32xf32, #tpu.memory_space<vmem>>, %arg15: memref<1x1x32xf32, #tpu.memory_space<vmem>>, %arg16: memref<1x1x32xf32, #tpu.memory_space<vmem>>, %arg17: memref<32x128xf32, #tpu.memory_space<vmem>>, %arg18: memref<1x128xf32, #tpu.memory_space<vmem>>, %arg19: memref<1x1xf32, #tpu.memory_space<smem>>, %arg20: memref<16x128xf32, #tpu.memory_space<vmem>>, %arg21: memref<16x32xf32, #tpu.memory_space<vmem>>) attributes {dimension_semantics = [#tpu.dimension_semantics<arbitrary>], iteration_bounds = array<i64: 2>, scalar_prefetch = 0 : i64, scratch_operands = 1 : i64, tpu.core_type = #tpu.core_type<tc>, window_params = [{pipeline_mode = #tpu.pipeline_mode<synchronous>, transform_indices = @transform_0, window_bounds = array<i64: 16, 32>}, {pipeline_mode = #tpu.pipeline_mode<synchronous>, transform_indices = @transform_1, window_bounds = array<i64: 2, 1, 8>}, {pipeline_mode = #tpu.pipeline_mode<synchronous>, transform_indices = @transform_2, window_bounds = array<i64: 16, 1>}, {pipeline_mode = #tpu.pipeline_mode<synchronous>, transform_indices = @transform_3, window_bounds = array<i64: 16, 1>}, {transform_indices = @transform_4, window_bounds = array<i64: 1, 32, 96>}, {transform_indices = @transform_5, window_bounds = array<i64: 1, 1, 96>}, {transform_indices = @transform_6, window_bounds = array<i64: 1, 32, 32>}, {transform_indices = @transform_7, window_bounds = array<i64: 1, 1, 32>}, {transform_indices = @transform_8, window_bounds = array<i64: 1, 1, 32>}, {transform_indices = @transform_9, window_bounds = array<i64: 1, 1, 32>}, {transform_indices = @transform_10, window_bounds = array<i64: 1, 32, 64>}, {transform_indices = @transform_11, window_bounds = array<i64: 1, 1, 64>}, {transform_indices = @transform_12, window_bounds = array<i64: 1, 64, 32>}, {transform_indices = @transform_13, window_bounds = array<i64: 1, 1, 32>}, {transform_indices = @transform_14, window_bounds = array<i64: 1, 1, 32>}, {transform_indices = @transform_15, window_bounds = array<i64: 1, 1, 32>}, {pipeline_mode = #tpu.pipeline_mode<synchronous>, transform_indices = @transform_16, window_bounds = array<i64: 32, 128>}, {pipeline_mode = #tpu.pipeline_mode<synchronous>, transform_indices = @transform_17, window_bounds = array<i64: 1, 128>}, {transform_indices = @transform_18, window_bounds = array<i64: 1, 1>}, {pipeline_mode = #tpu.pipeline_mode<synchronous>, transform_indices = @transform_19, window_bounds = array<i64: 16, 128>}]} {
    %c0_i32 = arith.constant 0 : i32
    %0 = arith.cmpi eq, %arg0, %c0_i32 : i32
    %1 = arith.extui %0 : i1 to i32
    %c0_i32_0 = arith.constant 0 : i32
    %2 = arith.cmpi ne, %1, %c0_i32_0 : i32
    scf.if %2 {
      %c0_71 = arith.constant 0 : index
      %c0_72 = arith.constant 0 : index
      %151 = vector.load %arg1[%c0_71, %c0_72] : memref<16x32xf32, #tpu.memory_space<vmem>>, vector<16x32xf32>
      %c0_73 = arith.constant 0 : index
      %c0_74 = arith.constant 0 : index
      %152 = vector.load %arg21[%c0_73, %c0_74] : memref<16x32xf32, #tpu.memory_space<vmem>>, vector<16x32xf32>
      tpu.vector_store %arg21[%c0_73, %c0_74], %151 {strides = array<i32>} : memref<16x32xf32, #tpu.memory_space<vmem>>, vector<16x32xf32>,
    } else {
    }
    %c0 = arith.constant 0 : index
    %c0_1 = arith.constant 0 : index
    %3 = vector.load %arg21[%c0, %c0_1] : memref<16x32xf32, #tpu.memory_space<vmem>>, vector<16x32xf32>
    %c0_2 = arith.constant 0 : index
    %c0_3 = arith.constant 0 : index
    %c0_4 = arith.constant 0 : index
    %4 = vector.load %arg2[%c0_2, %c0_3, %c0_4] : memref<2x1x8xf32, #tpu.memory_space<vmem>>, vector<2x1x8xf32>
    %c0_5 = arith.constant 0 : index
    %c0_6 = arith.constant 0 : index
    %c0_7 = arith.constant 0 : index
    %5 = vector.load %arg5[%c0_5, %c0_6, %c0_7] : memref<1x32x96xf32, #tpu.memory_space<vmem>>, vector<1x32x96xf32>
    %6 = vector.shape_cast %5 : vector<1x32x96xf32> to vector<32x96xf32>
    %cst = arith.constant dense<0.000000e+00> : vector<16x96xf32>
    %7 = tpu.matmul %3, %6, %cst {dimension_numbers = #tpu.dot_dimension_numbers<[1], [0], [0], [1], [0, 0, 1, 1], [], []>} : vector<16x32xf32>, vector<32x96xf32>, vector<16x96xf32> -> vector<16x96xf32>
    %c0_8 = arith.constant 0 : index
    %c0_9 = arith.constant 0 : index
    %c0_10 = arith.constant 0 : index
    %8 = vector.load %arg6[%c0_8, %c0_9, %c0_10] : memref<1x1x96xf32, #tpu.memory_space<vmem>>, vector<1x1x96xf32>
    %9 = vector.shape_cast %8 : vector<1x1x96xf32> to vector<1x96xf32>
    %10 = vector.broadcast %9 : vector<1x96xf32> to vector<16x96xf32>
    %11 = arith.addf %7, %10 : vector<16x96xf32>
    %12 = vector.extract_strided_slice %11 {offsets = [0, 0], sizes = [16, 16], strides = [1, 1]} : vector<16x96xf32> to vector<16x16xf32>
    %13 = vector.shape_cast %12 : vector<16x16xf32> to vector<2x8x16xf32>
    %14 = vector.extract_strided_slice %11 {offsets = [0, 32], sizes = [16, 16], strides = [1, 1]} : vector<16x96xf32> to vector<16x16xf32>
    %15 = vector.shape_cast %14 : vector<16x16xf32> to vector<2x8x16xf32>
    %16 = vector.extract_strided_slice %11 {offsets = [0, 64], sizes = [16, 16], strides = [1, 1]} : vector<16x96xf32> to vector<16x16xf32>
    %17 = vector.shape_cast %16 : vector<16x16xf32> to vector<2x8x16xf32>
    "tpu.trace_start"() <{level = 10 : i32, message = "bqd,bkd->bqk"}> : () -> ()
    %cst_11 = arith.constant dense<0.000000e+00> : vector<2x8x8xf32>
    %18 = tpu.matmul %13, %15, %cst_11 {dimension_numbers = #tpu.dot_dimension_numbers<[2], [2], [1], [1], [0, 0, 0, 1, 1, 1], [0], [0]>} : vector<2x8x16xf32>, vector<2x8x16xf32>, vector<2x8x8xf32> -> vector<2x8x8xf32>
    "tpu.trace_stop"() : () -> ()
    %cst_12 = arith.constant 2.500000e-01 : f32
    %19 = vector.broadcast %cst_12 : f32 to vector<2x8x8xf32>
    %20 = arith.mulf %18, %19 : vector<2x8x8xf32>
    %21 = vector.broadcast %4 : vector<2x1x8xf32> to vector<2x8x8xf32>
    %22 = arith.addf %20, %21 : vector<2x8x8xf32>
    %cst_13 = arith.constant dense<0xFF800000> : vector<2x8xf32>
    %23 = vector.multi_reduction <maximumf>, %22, %cst_13 [2] : vector<2x8x8xf32> to vector<2x8xf32>
    %24 = vector.shape_cast %23 : vector<2x8xf32> to vector<2x8x1xf32>
    %25 = vector.broadcast %24 : vector<2x8x1xf32> to vector<2x8x8xf32>
    %26 = arith.subf %22, %25 : vector<2x8x8xf32>
    %27 = math.exp %26 : vector<2x8x8xf32>
    %cst_14 = arith.constant dense<0.000000e+00> : vector<2x8xf32>
    %28 = vector.multi_reduction <add>, %27, %cst_14 [2] : vector<2x8x8xf32> to vector<2x8xf32>
    %29 = vector.shape_cast %28 : vector<2x8xf32> to vector<2x8x1xf32>
    %30 = tpu.reciprocal %29 {approx = true} : vector<2x8x1xf32> -> vector<2x8x1xf32>
    %31 = vector.broadcast %30 : vector<2x8x1xf32> to vector<2x8x8xf32>
    %32 = arith.mulf %27, %31 : vector<2x8x8xf32>
    "tpu.trace_start"() <{level = 10 : i32, message = "bqk,bkd->bqd"}> : () -> ()
    %cst_15 = arith.constant dense<0.000000e+00> : vector<2x8x16xf32>
    %33 = tpu.matmul %32, %17, %cst_15 {dimension_numbers = #tpu.dot_dimension_numbers<[2], [1], [1], [2], [0, 0, 0, 1, 1, 2], [0], [0]>} : vector<2x8x8xf32>, vector<2x8x16xf32>, vector<2x8x16xf32> -> vector<2x8x16xf32>
    "tpu.trace_stop"() : () -> ()
    %34 = vector.shape_cast %33 : vector<2x8x16xf32> to vector<16x16xf32>
    %35 = vector.extract_strided_slice %11 {offsets = [0, 16], sizes = [16, 16], strides = [1, 1]} : vector<16x96xf32> to vector<16x16xf32>
    %36 = vector.shape_cast %35 : vector<16x16xf32> to vector<2x8x16xf32>
    %37 = vector.extract_strided_slice %11 {offsets = [0, 48], sizes = [16, 16], strides = [1, 1]} : vector<16x96xf32> to vector<16x16xf32>
    %38 = vector.shape_cast %37 : vector<16x16xf32> to vector<2x8x16xf32>
    %39 = vector.extract_strided_slice %11 {offsets = [0, 80], sizes = [16, 16], strides = [1, 1]} : vector<16x96xf32> to vector<16x16xf32>
    %40 = vector.shape_cast %39 : vector<16x16xf32> to vector<2x8x16xf32>
    "tpu.trace_start"() <{level = 10 : i32, message = "bqd,bkd->bqk"}> : () -> ()
    %cst_16 = arith.constant dense<0.000000e+00> : vector<2x8x8xf32>
    %41 = tpu.matmul %36, %38, %cst_16 {dimension_numbers = #tpu.dot_dimension_numbers<[2], [2], [1], [1], [0, 0, 0, 1, 1, 1], [0], [0]>} : vector<2x8x16xf32>, vector<2x8x16xf32>, vector<2x8x8xf32> -> vector<2x8x8xf32>
    "tpu.trace_stop"() : () -> ()
    %cst_17 = arith.constant 2.500000e-01 : f32
    %42 = vector.broadcast %cst_17 : f32 to vector<2x8x8xf32>
    %43 = arith.mulf %41, %42 : vector<2x8x8xf32>
    %44 = vector.broadcast %4 : vector<2x1x8xf32> to vector<2x8x8xf32>
    %45 = arith.addf %43, %44 : vector<2x8x8xf32>
    %cst_18 = arith.constant dense<0xFF800000> : vector<2x8xf32>
    %46 = vector.multi_reduction <maximumf>, %45, %cst_18 [2] : vector<2x8x8xf32> to vector<2x8xf32>
    %47 = vector.shape_cast %46 : vector<2x8xf32> to vector<2x8x1xf32>
    %48 = vector.broadcast %47 : vector<2x8x1xf32> to vector<2x8x8xf32>
    %49 = arith.subf %45, %48 : vector<2x8x8xf32>
    %50 = math.exp %49 : vector<2x8x8xf32>
    %cst_19 = arith.constant dense<0.000000e+00> : vector<2x8xf32>
    %51 = vector.multi_reduction <add>, %50, %cst_19 [2] : vector<2x8x8xf32> to vector<2x8xf32>
    %52 = vector.shape_cast %51 : vector<2x8xf32> to vector<2x8x1xf32>
    %53 = tpu.reciprocal %52 {approx = true} : vector<2x8x1xf32> -> vector<2x8x1xf32>
    %54 = vector.broadcast %53 : vector<2x8x1xf32> to vector<2x8x8xf32>
    %55 = arith.mulf %50, %54 : vector<2x8x8xf32>
    "tpu.trace_start"() <{level = 10 : i32, message = "bqk,bkd->bqd"}> : () -> ()
    %cst_20 = arith.constant dense<0.000000e+00> : vector<2x8x16xf32>
    %56 = tpu.matmul %55, %40, %cst_20 {dimension_numbers = #tpu.dot_dimension_numbers<[2], [1], [1], [2], [0, 0, 0, 1, 1, 2], [0], [0]>} : vector<2x8x8xf32>, vector<2x8x16xf32>, vector<2x8x16xf32> -> vector<2x8x16xf32>
    "tpu.trace_stop"() : () -> ()
    %57 = vector.shape_cast %56 : vector<2x8x16xf32> to vector<16x16xf32>
    %58 = tpu.concatenate %34, %57 in 1 : vector<16x16xf32>, vector<16x16xf32> -> vector<16x32xf32>
    %c0_21 = arith.constant 0 : index
    %c0_22 = arith.constant 0 : index
    %c0_23 = arith.constant 0 : index
    %59 = vector.load %arg7[%c0_21, %c0_22, %c0_23] : memref<1x32x32xf32, #tpu.memory_space<vmem>>, vector<1x32x32xf32>
    %60 = vector.shape_cast %59 : vector<1x32x32xf32> to vector<32x32xf32>
    %cst_24 = arith.constant dense<0.000000e+00> : vector<16x32xf32>
    %61 = tpu.matmul %58, %60, %cst_24 {dimension_numbers = #tpu.dot_dimension_numbers<[1], [0], [0], [1], [0, 0, 1, 1], [], []>} : vector<16x32xf32>, vector<32x32xf32>, vector<16x32xf32> -> vector<16x32xf32>
    %c0_25 = arith.constant 0 : index
    %c0_26 = arith.constant 0 : index
    %c0_27 = arith.constant 0 : index
    %62 = vector.load %arg8[%c0_25, %c0_26, %c0_27] : memref<1x1x32xf32, #tpu.memory_space<vmem>>, vector<1x1x32xf32>
    %63 = vector.shape_cast %62 : vector<1x1x32xf32> to vector<1x32xf32>
    %64 = vector.broadcast %63 : vector<1x32xf32> to vector<16x32xf32>
    %65 = arith.addf %61, %64 : vector<16x32xf32>
    %66 = arith.addf %3, %65 : vector<16x32xf32>
    %c0_28 = arith.constant 0 : index
    %c0_29 = arith.constant 0 : index
    %c0_30 = arith.constant 0 : index
    %67 = vector.load %arg9[%c0_28, %c0_29, %c0_30] : memref<1x1x32xf32, #tpu.memory_space<vmem>>, vector<1x1x32xf32>
    %68 = vector.shape_cast %67 : vector<1x1x32xf32> to vector<1x32xf32>
    %c0_31 = arith.constant 0 : index
    %c0_32 = arith.constant 0 : index
    %c0_33 = arith.constant 0 : index
    %69 = vector.load %arg10[%c0_31, %c0_32, %c0_33] : memref<1x1x32xf32, #tpu.memory_space<vmem>>, vector<1x1x32xf32>
    %70 = vector.shape_cast %69 : vector<1x1x32xf32> to vector<1x32xf32>
    %cst_34 = arith.constant dense<0.000000e+00> : vector<16xf32>
    %71 = vector.multi_reduction <add>, %66, %cst_34 [1] : vector<16x32xf32> to vector<16xf32>
    %72 = vector.shape_cast %71 : vector<16xf32> to vector<16x1xf32>
    %cst_35 = arith.constant 3.200000e+01 : f32
    %73 = vector.broadcast %cst_35 : f32 to vector<16x1xf32>
    %74 = arith.divf %72, %73 : vector<16x1xf32>
    %75 = vector.broadcast %74 : vector<16x1xf32> to vector<16x32xf32>
    %76 = arith.subf %66, %75 : vector<16x32xf32>
    %77 = arith.mulf %76, %76 : vector<16x32xf32>
    %cst_36 = arith.constant dense<0.000000e+00> : vector<16xf32>
    %78 = vector.multi_reduction <add>, %77, %cst_36 [1] : vector<16x32xf32> to vector<16xf32>
    %79 = vector.shape_cast %78 : vector<16xf32> to vector<16x1xf32>
    %cst_37 = arith.constant 3.200000e+01 : f32
    %80 = vector.broadcast %cst_37 : f32 to vector<16x1xf32>
    %81 = arith.divf %79, %80 : vector<16x1xf32>
    %82 = vector.broadcast %74 : vector<16x1xf32> to vector<16x32xf32>
    %83 = arith.subf %66, %82 : vector<16x32xf32>
    %cst_38 = arith.constant 9.99999974E-6 : f32
    %84 = vector.broadcast %cst_38 : f32 to vector<16x1xf32>
    %85 = arith.addf %81, %84 : vector<16x1xf32>
    %86 = math.rsqrt %85 : vector<16x1xf32>
    %87 = vector.broadcast %86 : vector<16x1xf32> to vector<16x32xf32>
    %88 = arith.mulf %83, %87 : vector<16x32xf32>
    %89 = vector.broadcast %68 : vector<1x32xf32> to vector<16x32xf32>
    %90 = arith.mulf %88, %89 : vector<16x32xf32>
    %91 = vector.broadcast %70 : vector<1x32xf32> to vector<16x32xf32>
    %92 = arith.addf %90, %91 : vector<16x32xf32>
    %c0_39 = arith.constant 0 : index
    %c0_40 = arith.constant 0 : index
    %c0_41 = arith.constant 0 : index
    %93 = vector.load %arg11[%c0_39, %c0_40, %c0_41] : memref<1x32x64xf32, #tpu.memory_space<vmem>>, vector<1x32x64xf32>
    %94 = vector.shape_cast %93 : vector<1x32x64xf32> to vector<32x64xf32>
    %cst_42 = arith.constant dense<0.000000e+00> : vector<16x64xf32>
    %95 = tpu.matmul %92, %94, %cst_42 {dimension_numbers = #tpu.dot_dimension_numbers<[1], [0], [0], [1], [0, 0, 1, 1], [], []>} : vector<16x32xf32>, vector<32x64xf32>, vector<16x64xf32> -> vector<16x64xf32>
    %c0_43 = arith.constant 0 : index
    %c0_44 = arith.constant 0 : index
    %c0_45 = arith.constant 0 : index
    %96 = vector.load %arg12[%c0_43, %c0_44, %c0_45] : memref<1x1x64xf32, #tpu.memory_space<vmem>>, vector<1x1x64xf32>
    %97 = vector.shape_cast %96 : vector<1x1x64xf32> to vector<1x64xf32>
    %98 = vector.broadcast %97 : vector<1x64xf32> to vector<16x64xf32>
    %99 = arith.addf %95, %98 : vector<16x64xf32>
    %100 = arith.mulf %99, %99 : vector<16x64xf32>
    %101 = arith.mulf %99, %100 : vector<16x64xf32>
    %cst_46 = arith.constant 4.471500e-02 : f32
    %102 = vector.broadcast %cst_46 : f32 to vector<16x64xf32>
    %103 = arith.mulf %102, %101 : vector<16x64xf32>
    %104 = arith.addf %99, %103 : vector<16x64xf32>
    %cst_47 = arith.constant 0.797884583 : f32
    %105 = vector.broadcast %cst_47 : f32 to vector<16x64xf32>
    %106 = arith.mulf %105, %104 : vector<16x64xf32>
    %107 = math.tanh %106 : vector<16x64xf32>
    %cst_48 = arith.constant 1.000000e+00 : f32
    %108 = vector.broadcast %cst_48 : f32 to vector<16x64xf32>
    %109 = arith.addf %108, %107 : vector<16x64xf32>
    %cst_49 = arith.constant 5.000000e-01 : f32
    %110 = vector.broadcast %cst_49 : f32 to vector<16x64xf32>
    %111 = arith.mulf %110, %109 : vector<16x64xf32>
    %112 = arith.mulf %99, %111 : vector<16x64xf32>
    %c0_50 = arith.constant 0 : index
    %c0_51 = arith.constant 0 : index
    %c0_52 = arith.constant 0 : index
    %113 = vector.load %arg13[%c0_50, %c0_51, %c0_52] : memref<1x64x32xf32, #tpu.memory_space<vmem>>, vector<1x64x32xf32>
    %114 = vector.shape_cast %113 : vector<1x64x32xf32> to vector<64x32xf32>
    %cst_53 = arith.constant dense<0.000000e+00> : vector<16x32xf32>
    %115 = tpu.matmul %112, %114, %cst_53 {dimension_numbers = #tpu.dot_dimension_numbers<[1], [0], [0], [1], [0, 0, 1, 1], [], []>} : vector<16x64xf32>, vector<64x32xf32>, vector<16x32xf32> -> vector<16x32xf32>
    %c0_54 = arith.constant 0 : index
    %c0_55 = arith.constant 0 : index
    %c0_56 = arith.constant 0 : index
    %116 = vector.load %arg14[%c0_54, %c0_55, %c0_56] : memref<1x1x32xf32, #tpu.memory_space<vmem>>, vector<1x1x32xf32>
    %117 = vector.shape_cast %116 : vector<1x1x32xf32> to vector<1x32xf32>
    %118 = vector.broadcast %117 : vector<1x32xf32> to vector<16x32xf32>
    %119 = arith.addf %115, %118 : vector<16x32xf32>
    %120 = arith.addf %92, %119 : vector<16x32xf32>
    %c0_57 = arith.constant 0 : index
    %c0_58 = arith.constant 0 : index
    %c0_59 = arith.constant 0 : index
    %121 = vector.load %arg15[%c0_57, %c0_58, %c0_59] : memref<1x1x32xf32, #tpu.memory_space<vmem>>, vector<1x1x32xf32>
    %122 = vector.shape_cast %121 : vector<1x1x32xf32> to vector<1x32xf32>
    %c0_60 = arith.constant 0 : index
    %c0_61 = arith.constant 0 : index
    %c0_62 = arith.constant 0 : index
    %123 = vector.load %arg16[%c0_60, %c0_61, %c0_62] : memref<1x1x32xf32, #tpu.memory_space<vmem>>, vector<1x1x32xf32>
    %124 = vector.shape_cast %123 : vector<1x1x32xf32> to vector<1x32xf32>
    %cst_63 = arith.constant dense<0.000000e+00> : vector<16xf32>
    %125 = vector.multi_reduction <add>, %120, %cst_63 [1] : vector<16x32xf32> to vector<16xf32>
    %126 = vector.shape_cast %125 : vector<16xf32> to vector<16x1xf32>
    %cst_64 = arith.constant 3.200000e+01 : f32
    %127 = vector.broadcast %cst_64 : f32 to vector<16x1xf32>
    %128 = arith.divf %126, %127 : vector<16x1xf32>
    %129 = vector.broadcast %128 : vector<16x1xf32> to vector<16x32xf32>
    %130 = arith.subf %120, %129 : vector<16x32xf32>
    %131 = arith.mulf %130, %130 : vector<16x32xf32>
    %cst_65 = arith.constant dense<0.000000e+00> : vector<16xf32>
    %132 = vector.multi_reduction <add>, %131, %cst_65 [1] : vector<16x32xf32> to vector<16xf32>
    %133 = vector.shape_cast %132 : vector<16xf32> to vector<16x1xf32>
    %cst_66 = arith.constant 3.200000e+01 : f32
    %134 = vector.broadcast %cst_66 : f32 to vector<16x1xf32>
    %135 = arith.divf %133, %134 : vector<16x1xf32>
    %136 = vector.broadcast %128 : vector<16x1xf32> to vector<16x32xf32>
    %137 = arith.subf %120, %136 : vector<16x32xf32>
    %cst_67 = arith.constant 9.99999974E-6 : f32
    %138 = vector.broadcast %cst_67 : f32 to vector<16x1xf32>
    %139 = arith.addf %135, %138 : vector<16x1xf32>
    %140 = math.rsqrt %139 : vector<16x1xf32>
    %141 = vector.broadcast %140 : vector<16x1xf32> to vector<16x32xf32>
    %142 = arith.mulf %137, %141 : vector<16x32xf32>
    %143 = vector.broadcast %122 : vector<1x32xf32> to vector<16x32xf32>
    %144 = arith.mulf %142, %143 : vector<16x32xf32>
    %145 = vector.broadcast %124 : vector<1x32xf32> to vector<16x32xf32>
    %146 = arith.addf %144, %145 : vector<16x32xf32>
    %c0_68 = arith.constant 0 : index
    %c0_69 = arith.constant 0 : index
    %147 = vector.load %arg21[%c0_68, %c0_69] : memref<16x32xf32, #tpu.memory_space<vmem>>, vector<16x32xf32>
    tpu.vector_store %arg21[%c0_68, %c0_69], %146 {strides = array<i32>} : memref<16x32xf32, #tpu.memory_space<vmem>>, vector<16x32xf32>,
    %c1_i32 = arith.constant 1 : i32
    %148 = arith.cmpi eq, %arg0, %c1_i32 : i32
    %149 = arith.extui %148 : i1 to i32
    %c0_i32_70 = arith.constant 0 : i32
    %150 = arith.cmpi ne, %149, %c0_i32_70 : i32
    scf.if %150 {
      %c0_71 = arith.constant 0 : index
      %c0_72 = arith.constant 0 : index
      %151 = vector.load %arg17[%c0_71, %c0_72] : memref<32x128xf32, #tpu.memory_space<vmem>>, vector<32x128xf32>
      %cst_73 = arith.constant dense<0.000000e+00> : vector<16x128xf32>
      %152 = tpu.matmul %146, %151, %cst_73 {dimension_numbers = #tpu.dot_dimension_numbers<[1], [0], [0], [1], [0, 0, 1, 1], [], []>} : vector<16x32xf32>, vector<32x128xf32>, vector<16x128xf32> -> vector<16x128xf32>
      %c0_74 = arith.constant 0 : index
      %c0_75 = arith.constant 0 : index
      %153 = vector.load %arg18[%c0_74, %c0_75] : memref<1x128xf32, #tpu.memory_space<vmem>>, vector<1x128xf32>
      %154 = vector.broadcast %153 : vector<1x128xf32> to vector<16x128xf32>
      %155 = arith.addf %152, %154 : vector<16x128xf32>
      %c0_76 = arith.constant 0 : index
      %c0_77 = arith.constant 0 : index
      %156 = vector.load %arg20[%c0_76, %c0_77] : memref<16x128xf32, #tpu.memory_space<vmem>>, vector<16x128xf32>
      tpu.vector_store %arg20[%c0_76, %c0_77], %155 {strides = array<i32>} : memref<16x128xf32, #tpu.memory_space<vmem>>, vector<16x128xf32>,
      %157 = tpu.iota {dimensions = array<i32: 1>} : vector<16x128xi32>
      %c5_i32 = arith.constant 5 : i32
      %158 = vector.broadcast %c5_i32 : i32 to vector<16x128xi32>
      %159 = arith.cmpi slt, %157, %158 : vector<16x128xi32>
      %cst_78 = arith.constant -1.000000e+09 : f32
      %160 = vector.broadcast %cst_78 : f32 to vector<16x128xf32>
      %161 = arith.select %159, %155, %160 : vector<16x128xi1>, vector<16x128xf32>
      %cst_79 = arith.constant dense<0xFF800000> : vector<16xf32>
      %162 = vector.multi_reduction <maximumf>, %161, %cst_79 [1] : vector<16x128xf32> to vector<16xf32>
      %163 = vector.shape_cast %162 : vector<16xf32> to vector<16x1xf32>
      %164 = vector.broadcast %163 : vector<16x1xf32> to vector<16x128xf32>
      %165 = arith.subf %161, %164 : vector<16x128xf32>
      %166 = math.exp %165 : vector<16x128xf32>
      %cst_80 = arith.constant dense<0.000000e+00> : vector<16xf32>
      %167 = vector.multi_reduction <add>, %166, %cst_80 [1] : vector<16x128xf32> to vector<16xf32>
      %168 = vector.shape_cast %167 : vector<16xf32> to vector<16x1xf32>
      %169 = math.log %168 : vector<16x1xf32>
      %170 = arith.addf %169, %163 : vector<16x1xf32>
      %c0_81 = arith.constant 0 : index
      %c0_82 = arith.constant 0 : index
      %171 = vector.load %arg4[%c0_81, %c0_82] : memref<16x1xi32, #tpu.memory_space<vmem>>, vector<16x1xi32>
      %172 = vector.broadcast %171 : vector<16x1xi32> to vector<16x128xi32>
      %173 = arith.cmpi eq, %157, %172 : vector<16x128xi32>
      %174 = arith.extui %173 : vector<16x128xi1> to vector<16x128xi32>
      %175 = arith.sitofp %174 : vector<16x128xi32> to vector<16x128xf32>
      %176 = arith.mulf %161, %175 : vector<16x128xf32>
      %cst_83 = arith.constant dense<0.000000e+00> : vector<16xf32>
      %177 = vector.multi_reduction <add>, %176, %cst_83 [1] : vector<16x128xf32> to vector<16xf32>
      %178 = vector.shape_cast %177 : vector<16xf32> to vector<16x1xf32>
      %179 = arith.subf %170, %178 : vector<16x1xf32>
      %c0_84 = arith.constant 0 : index
      %c0_85 = arith.constant 0 : index
      %180 = vector.load %arg3[%c0_84, %c0_85] : memref<16x1xf32, #tpu.memory_space<vmem>>, vector<16x1xf32>
      %181 = arith.mulf %179, %180 : vector<16x1xf32>
      %182 = vector.shape_cast %181 : vector<16x1xf32> to vector<1x16x1xf32>
      %cst_86 = arith.constant dense<0.000000e+00> : vector<1xf32>
      %183 = vector.multi_reduction <add>, %182, %cst_86 [1, 2] : vector<1x16x1xf32> to vector<1xf32>
      %184 = vector.shape_cast %183 : vector<1xf32> to vector<1x1x1xf32>
      %185 = vector.extract %184[0, 0, 0] : f32 from vector<1x1x1xf32>
      %186 = vector.shape_cast %180 : vector<16x1xf32> to vector<1x16x1xf32>
      %cst_87 = arith.constant dense<0.000000e+00> : vector<1xf32>
      %187 = vector.multi_reduction <add>, %186, %cst_87 [1, 2] : vector<1x16x1xf32> to vector<1xf32>
      %188 = vector.shape_cast %187 : vector<1xf32> to vector<1x1x1xf32>
      %189 = vector.extract %188[0, 0, 0] : f32 from vector<1x1x1xf32>
      %cst_88 = arith.constant 1.000000e+00 : f32
      %190 = arith.maximumf %189, %cst_88 : f32
      %191 = arith.divf %185, %190 : f32
      %c0_89 = arith.constant 0 : index
      %c0_90 = arith.constant 0 : index
      %192 = memref.load %arg19[%c0_89, %c0_90] : memref<1x1xf32, #tpu.memory_space<smem>>
      memref.store %191, %arg19[%c0_89, %c0_90] : memref<1x1xf32, #tpu.memory_space<smem>>
    } else {
    }
    return
  }
  func.func @transform_0(%arg0: i32) -> (i32, i32) {
    %c0_i32 = arith.constant 0 : i32
    %c0_i32_0 = arith.constant 0 : i32
    %c0_i32_1 = arith.constant 0 : i32
    return %c0_i32, %c0_i32_0 : i32, i32
  }
  func.func @transform_1(%arg0: i32) -> (i32, i32, i32) {
    %c0_i32 = arith.constant 0 : i32
    %c0_i32_0 = arith.constant 0 : i32
    %c0_i32_1 = arith.constant 0 : i32
    %c0_i32_2 = arith.constant 0 : i32
    return %c0_i32, %c0_i32_0, %c0_i32_1 : i32, i32, i32
  }
  func.func @transform_2(%arg0: i32) -> (i32, i32) {
    %c0_i32 = arith.constant 0 : i32
    %c0_i32_0 = arith.constant 0 : i32
    %c0_i32_1 = arith.constant 0 : i32
    return %c0_i32, %c0_i32_0 : i32, i32
  }
  func.func @transform_3(%arg0: i32) -> (i32, i32) {
    %c0_i32 = arith.constant 0 : i32
    %c0_i32_0 = arith.constant 0 : i32
    %c0_i32_1 = arith.constant 0 : i32
    return %c0_i32, %c0_i32_0 : i32, i32
  }
  func.func @transform_4(%arg0: i32) -> (i32, i32, i32) {
    %c0_i32 = arith.constant 0 : i32
    %c0_i32_0 = arith.constant 0 : i32
    %c0_i32_1 = arith.constant 0 : i32
    return %arg0, %c0_i32, %c0_i32_0 : i32, i32, i32
  }
  func.func @transform_5(%arg0: i32) -> (i32, i32, i32) {
    %c0_i32 = arith.constant 0 : i32
    %c0_i32_0 = arith.constant 0 : i32
    %c0_i32_1 = arith.constant 0 : i32
    return %arg0, %c0_i32, %c0_i32_0 : i32, i32, i32
  }
  func.func @transform_6(%arg0: i32) -> (i32, i32, i32) {
    %c0_i32 = arith.constant 0 : i32
    %c0_i32_0 = arith.constant 0 : i32
    %c0_i32_1 = arith.constant 0 : i32
    return %arg0, %c0_i32, %c0_i32_0 : i32, i32, i32
  }
  func.func @transform_7(%arg0: i32) -> (i32, i32, i32) {
    %c0_i32 = arith.constant 0 : i32
    %c0_i32_0 = arith.constant 0 : i32
    %c0_i32_1 = arith.constant 0 : i32
    return %arg0, %c0_i32, %c0_i32_0 : i32, i32, i32
  }
  func.func @transform_8(%arg0: i32) -> (i32, i32, i32) {
    %c0_i32 = arith.constant 0 : i32
    %c0_i32_0 = arith.constant 0 : i32
    %c0_i32_1 = arith.constant 0 : i32
    return %arg0, %c0_i32, %c0_i32_0 : i32, i32, i32
  }
  func.func @transform_9(%arg0: i32) -> (i32, i32, i32) {
    %c0_i32 = arith.constant 0 : i32
    %c0_i32_0 = arith.constant 0 : i32
    %c0_i32_1 = arith.constant 0 : i32
    return %arg0, %c0_i32, %c0_i32_0 : i32, i32, i32
  }
  func.func @transform_10(%arg0: i32) -> (i32, i32, i32) {
    %c0_i32 = arith.constant 0 : i32
    %c0_i32_0 = arith.constant 0 : i32
    %c0_i32_1 = arith.constant 0 : i32
    return %arg0, %c0_i32, %c0_i32_0 : i32, i32, i32
  }
  func.func @transform_11(%arg0: i32) -> (i32, i32, i32) {
    %c0_i32 = arith.constant 0 : i32
    %c0_i32_0 = arith.constant 0 : i32
    %c0_i32_1 = arith.constant 0 : i32
    return %arg0, %c0_i32, %c0_i32_0 : i32, i32, i32
  }
  func.func @transform_12(%arg0: i32) -> (i32, i32, i32) {
    %c0_i32 = arith.constant 0 : i32
    %c0_i32_0 = arith.constant 0 : i32
    %c0_i32_1 = arith.constant 0 : i32
    return %arg0, %c0_i32, %c0_i32_0 : i32, i32, i32
  }
  func.func @transform_13(%arg0: i32) -> (i32, i32, i32) {
    %c0_i32 = arith.constant 0 : i32
    %c0_i32_0 = arith.constant 0 : i32
    %c0_i32_1 = arith.constant 0 : i32
    return %arg0, %c0_i32, %c0_i32_0 : i32, i32, i32
  }
  func.func @transform_14(%arg0: i32) -> (i32, i32, i32) {
    %c0_i32 = arith.constant 0 : i32
    %c0_i32_0 = arith.constant 0 : i32
    %c0_i32_1 = arith.constant 0 : i32
    return %arg0, %c0_i32, %c0_i32_0 : i32, i32, i32
  }
  func.func @transform_15(%arg0: i32) -> (i32, i32, i32) {
    %c0_i32 = arith.constant 0 : i32
    %c0_i32_0 = arith.constant 0 : i32
    %c0_i32_1 = arith.constant 0 : i32
    return %arg0, %c0_i32, %c0_i32_0 : i32, i32, i32
  }
  func.func @transform_16(%arg0: i32) -> (i32, i32) {
    %c0_i32 = arith.constant 0 : i32
    %c0_i32_0 = arith.constant 0 : i32
    %c0_i32_1 = arith.constant 0 : i32
    return %c0_i32, %c0_i32_0 : i32, i32
  }
  func.func @transform_17(%arg0: i32) -> (i32, i32) {
    %c0_i32 = arith.constant 0 : i32
    %c0_i32_0 = arith.constant 0 : i32
    %c0_i32_1 = arith.constant 0 : i32
    return %c0_i32, %c0_i32_0 : i32, i32
  }
  func.func @transform_18(%arg0: i32) -> (i32, i32) {
    %c0_i32 = arith.constant 0 : i32
    %c0_i32_0 = arith.constant 0 : i32
    %c0_i32_1 = arith.constant 0 : i32
    return %c0_i32, %c0_i32_0 : i32, i32
  }
  func.func @transform_19(%arg0: i32) -> (i32, i32) {
    %c0_i32 = arith.constant 0 : i32
    %c0_i32_0 = arith.constant 0 : i32
    %c0_i32_1 = arith.constant 0 : i32
    return %c0_i32, %c0_i32_0 : i32, i32
  }
}

</mosaic_0001>

<llo_original>
// kernel: forward.1
$region0: #{forward.1}
  #allocation0 [shape = 'u32[]', space=smem, size = 0x4, offset = 0x4, fixed_abs, tag = 'smem constant byte address 0x4 - core index']
  #allocation1 [shape = 'u32[144,128]{1,0:T(1,128)}', space=vmem, size = 0x12000, scoped, tag = 'internal scratch']
  #allocation2 [shape = 'f32[16,32]{1,0:T(8,128)}', space=vmem, size = 0x2000, scoped, tag = 'scratch operand']
  %s0 = inlined_call_operand.vmem [shape: f32[16,32], index: 0, kind: input, shape index: {}]
  %s1 = inlined_call_operand.vmem [shape: f32[2,1,8], index: 1, kind: input, shape index: {}]
  %s2 = inlined_call_operand.vmem [shape: f32[16,1], index: 2, kind: input, shape index: {}]
  %s3 = inlined_call_operand.vmem [shape: s32[16,1], index: 3, kind: input, shape index: {}]
  %s4 = inlined_call_operand.vmem [shape: f32[2,32,96], index: 4, kind: input, shape index: {}]
  %s5 = inlined_call_operand.vmem [shape: f32[2,1,96], index: 5, kind: input, shape index: {}]
  %s6 = inlined_call_operand.vmem [shape: f32[2,32,32], index: 6, kind: input, shape index: {}]
  %s7 = inlined_call_operand.vmem [shape: f32[2,1,32], index: 7, kind: input, shape index: {}]
  %s8 = inlined_call_operand.vmem [shape: f32[2,1,32], index: 8, kind: input, shape index: {}]
  %s9 = inlined_call_operand.vmem [shape: f32[2,1,32], index: 9, kind: input, shape index: {}]
  %s10 = inlined_call_operand.vmem [shape: f32[2,32,64], index: 10, kind: input, shape index: {}]
  %s11 = inlined_call_operand.vmem [shape: f32[2,1,64], index: 11, kind: input, shape index: {}]
  %s12 = inlined_call_operand.vmem [shape: f32[2,64,32], index: 12, kind: input, shape index: {}]
  %s13 = inlined_call_operand.vmem [shape: f32[2,1,32], index: 13, kind: input, shape index: {}]
  %s14 = inlined_call_operand.vmem [shape: f32[2,1,32], index: 14, kind: input, shape index: {}]
  %s15 = inlined_call_operand.vmem [shape: f32[2,1,32], index: 15, kind: input, shape index: {}]
  %s16 = inlined_call_operand.vmem [shape: f32[32,128], index: 16, kind: input, shape index: {}]
  %s17 = inlined_call_operand.vmem [shape: f32[1,128], index: 17, kind: input, shape index: {}]
  %s18 = inlined_call_operand.hbm [shape: f32[1,1], index: 18, kind: output, shape index: {0}]
  %s19 = inlined_call_operand.vmem [shape: f32[16,128], index: 19, kind: output, shape index: {1}]
  %20 = xla_tuple %s18, %s19
  %s21 = sld [smem:[#allocation0]]
  $region121: #{forward.1} parent=0
    _
  %s23 = ssub.s32 1, %s21
  %s24 = scalar_select 0, %s23, %s21
  $region1: #{forward.1} parent=0
    #allocation3 [shape = 'u8[512]{0}', space=smem, size = 0x200, scoped, tag = 'output window, operand 0, single buffered']
    #allocation4 [shape = 's32[2]{0}', space=sflag, size = 0x8, scoped, tag = 'scoped memory for forward.1']
    %25 = vsyncpa [#allocation4], 0
    loop: start=0, step=1, limit=4
    $region2: #{forward.1} parent=1 // loop_pre_header
      _
    $region3: #{forward.1} parent=1 // loop_header
      %s27 = sphi 0, %s31
      %p28 = scmp.ge.s32.totalorder %s27, 4
      %s35 = sphi 0, %s35
      %s37 = sphi 0, %s35
      %s38 = sphi 0, %s37
      %s52 = sphi 0, %s38
      %s56 = sphi 0, %s56
      %s58 = sphi 0, %s56
      %s59 = sphi 0, %s58
      %s73 = sphi 0, %s59
      %s77 = sphi 0, %s77
      %s79 = sphi 0, %s77
      %s80 = sphi 0, %s79
      %s94 = sphi 0, %s80
      %s98 = sphi 0, %s98
      %s100 = sphi 0, %s98
      %s101 = sphi 0, %s100
      %s115 = sphi 0, %s101
      %s121 = sphi 0, %s123
      %s124 = sphi 0, %s121
      %s125 = sphi 0, %s124
      %s141 = sphi 0, %s125
      %s147 = sphi 0, %s149
      %s150 = sphi 0, %s147
      %s151 = sphi 0, %s150
      %s167 = sphi 0, %s151
      %s173 = sphi 0, %s175
      %s176 = sphi 0, %s173
      %s177 = sphi 0, %s176
      %s193 = sphi 0, %s177
      %s199 = sphi 0, %s201
      %s202 = sphi 0, %s199
      %s203 = sphi 0, %s202
      %s219 = sphi 0, %s203
      %s225 = sphi 0, %s227
      %s228 = sphi 0, %s225
      %s229 = sphi 0, %s228
      %s245 = sphi 0, %s229
      %s251 = sphi 0, %s253
      %s254 = sphi 0, %s251
      %s255 = sphi 0, %s254
      %s271 = sphi 0, %s255
      %s277 = sphi 0, %s279
      %s280 = sphi 0, %s277
      %s281 = sphi 0, %s280
      %s297 = sphi 0, %s281
      %s303 = sphi 0, %s305
      %s306 = sphi 0, %s303
      %s307 = sphi 0, %s306
      %s323 = sphi 0, %s307
      %s329 = sphi 0, %s331
      %s332 = sphi 0, %s329
      %s333 = sphi 0, %s332
      %s349 = sphi 0, %s333
      %s355 = sphi 0, %s357
      %s358 = sphi 0, %s355
      %s359 = sphi 0, %s358
      %s375 = sphi 0, %s359
      %s381 = sphi 0, %s383
      %s384 = sphi 0, %s381
      %s385 = sphi 0, %s384
      %s401 = sphi 0, %s385
      %s407 = sphi 0, %s409
      %s410 = sphi 0, %s407
      %s411 = sphi 0, %s410
      %s427 = sphi 0, %s411
      %s431 = sphi 0, %s431
      %s433 = sphi 0, %s431
      %s434 = sphi 0, %s433
      %s448 = sphi 0, %s434
      %s452 = sphi 0, %s452
      %s454 = sphi 0, %s452
      %s455 = sphi 0, %s454
      %s469 = sphi 0, %s455
      %s473 = sphi 0, %s473
      %s475 = sphi 0, %s473
      %s476 = sphi 0, %s475
      %s490 = sphi 0, %s476
      %s494 = sphi 0, %s494
      %s496 = sphi 0, %s494
      %s497 = sphi 0, %s496
      %s511 = sphi 0, %s497
    $region4: #{forward.1} parent=1 // loop_header_branch
      %30 = sbr.rel (%p28) target = $region8
    $region5: #{forward.1} parent=1 // loop_body
      %s32 = ssub.s32 %s27, 1
      %s33 = ssub.s32 %s27, 2
      %s34 = sadd.s32 %s27, 1
      %s36 = sadd.s32 %s35, 1
      %p39 = scmp.eq.s32.totalorder %s27, 1
      %p40 = scmp.ne.s32.totalorder %s35, %s37
      %p41 = scmp.eq.s32.totalorder %s27, 0
      %p42 = por %p40, %p41
      %p43 = scmp.ne.s32.totalorder %s35, %s37
      %p44 = scmp.eq.s32.totalorder %s32, 1
      %p45 = por %p43, %p44
      %p46 = scmp.ne.s32.totalorder %s37, %s38
      %p47 = scmp.eq.s32.totalorder %s32, 0
      %p48 = por %p46, %p47
      %p49 = scmp.ne.s32.totalorder %s37, %s38
      %p50 = scmp.eq.s32.totalorder %s33, 1
      %p51 = por %p49, %p50
      %p53 = scmp.ne.s32.totalorder %s38, %s52
      %p54 = scmp.eq.s32.totalorder %s33, 0
      %p55 = por %p53, %p54
      %s57 = sadd.s32 %s56, 1
      %p60 = scmp.eq.s32.totalorder %s27, 1
      %p61 = scmp.ne.s32.totalorder %s56, %s58
      %p62 = scmp.eq.s32.totalorder %s27, 0
      %p63 = por %p61, %p62
      %p64 = scmp.ne.s32.totalorder %s56, %s58
      %p65 = scmp.eq.s32.totalorder %s32, 1
      %p66 = por %p64, %p65
      %p67 = scmp.ne.s32.totalorder %s58, %s59
      %p68 = scmp.eq.s32.totalorder %s32, 0
      %p69 = por %p67, %p68
      %p70 = scmp.ne.s32.totalorder %s58, %s59
      %p71 = scmp.eq.s32.totalorder %s33, 1
      %p72 = por %p70, %p71
      %p74 = scmp.ne.s32.totalorder %s59, %s73
      %p75 = scmp.eq.s32.totalorder %s33, 0
      %p76 = por %p74, %p75
      %s78 = sadd.s32 %s77, 1
      %p81 = scmp.eq.s32.totalorder %s27, 1
      %p82 = scmp.ne.s32.totalorder %s77, %s79
      %p83 = scmp.eq.s32.totalorder %s27, 0
      %p84 = por %p82, %p83
      %p85 = scmp.ne.s32.totalorder %s77, %s79
      %p86 = scmp.eq.s32.totalorder %s32, 1
      %p87 = por %p85, %p86
      %p88 = scmp.ne.s32.totalorder %s79, %s80
      %p89 = scmp.eq.s32.totalorder %s32, 0
      %p90 = por %p88, %p89
      %p91 = scmp.ne.s32.totalorder %s79, %s80
      %p92 = scmp.eq.s32.totalorder %s33, 1
      %p93 = por %p91, %p92
      %p95 = scmp.ne.s32.totalorder %s80, %s94
      %p96 = scmp.eq.s32.totalorder %s33, 0
      %p97 = por %p95, %p96
      %s99 = sadd.s32 %s98, 1
      %p102 = scmp.eq.s32.totalorder %s27, 1
      %p103 = scmp.ne.s32.totalorder %s98, %s100
      %p104 = scmp.eq.s32.totalorder %s27, 0
      %p105 = por %p103, %p104
      %p106 = scmp.ne.s32.totalorder %s98, %s100
      %p107 = scmp.eq.s32.totalorder %s32, 1
      %p108 = por %p106, %p107
      %p109 = scmp.ne.s32.totalorder %s100, %s101
      %p110 = scmp.eq.s32.totalorder %s32, 0
      %p111 = por %p109, %p110
      %p112 = scmp.ne.s32.totalorder %s100, %s101
      %p113 = scmp.eq.s32.totalorder %s33, 1
      %p114 = por %p112, %p113
      %p116 = scmp.ne.s32.totalorder %s101, %s115
      %p117 = scmp.eq.s32.totalorder %s33, 0
      %p118 = por %p116, %p117
      %s119 = ssub.s32 %s27, %s34
      %p120 = scmp.eq.s32.totalorder %s119, 0
      %s122 = sadd.s32 %s121, 1
      %s123 = scalar_select %p120, %s121, %s122
      %p126 = pneg %p120
      %p127 = scmp.eq.s32.totalorder %s27, 1
      %p128 = por %p126, %p127
      %p129 = scmp.ne.s32.totalorder %s121, %s124
      %p130 = scmp.eq.s32.totalorder %s27, 0
      %p131 = por %p129, %p130
      %p132 = scmp.ne.s32.totalorder %s121, %s124
      %p133 = scmp.eq.s32.totalorder %s32, 1
      %p134 = por %p132, %p133
      %p135 = scmp.ne.s32.totalorder %s124, %s125
      %p136 = scmp.eq.s32.totalorder %s32, 0
      %p137 = por %p135, %p136
      %p138 = scmp.ne.s32.totalorder %s124, %s125
      %p139 = scmp.eq.s32.totalorder %s33, 1
      %p140 = por %p138, %p139
      %p142 = scmp.ne.s32.totalorder %s125, %s141
      %p143 = scmp.eq.s32.totalorder %s33, 0
      %p144 = por %p142, %p143
      %s145 = ssub.s32 %s27, %s34
      %p146 = scmp.eq.s32.totalorder %s145, 0
      %s148 = sadd.s32 %s147, 1
      %s149 = scalar_select %p146, %s147, %s148
      %p152 = pneg %p146
      %p153 = scmp.eq.s32.totalorder %s27, 1
      %p154 = por %p152, %p153
      %p155 = scmp.ne.s32.totalorder %s147, %s150
      %p156 = scmp.eq.s32.totalorder %s27, 0
      %p157 = por %p155, %p156
      %p158 = scmp.ne.s32.totalorder %s147, %s150
      %p159 = scmp.eq.s32.totalorder %s32, 1
      %p160 = por %p158, %p159
      %p161 = scmp.ne.s32.totalorder %s150, %s151
      %p162 = scmp.eq.s32.totalorder %s32, 0
      %p163 = por %p161, %p162
      %p164 = scmp.ne.s32.totalorder %s150, %s151
      %p165 = scmp.eq.s32.totalorder %s33, 1
      %p166 = por %p164, %p165
      %p168 = scmp.ne.s32.totalorder %s151, %s167
      %p169 = scmp.eq.s32.totalorder %s33, 0
      %p170 = por %p168, %p169
      %s171 = ssub.s32 %s27, %s34
      %p172 = scmp.eq.s32.totalorder %s171, 0
      %s174 = sadd.s32 %s173, 1
      %s175 = scalar_select %p172, %s173, %s174
      %p178 = pneg %p172
      %p179 = scmp.eq.s32.totalorder %s27, 1
      %p180 = por %p178, %p179
      %p181 = scmp.ne.s32.totalorder %s173, %s176
      %p182 = scmp.eq.s32.totalorder %s27, 0
      %p183 = por %p181, %p182
      %p184 = scmp.ne.s32.totalorder %s173, %s176
      %p185 = scmp.eq.s32.totalorder %s32, 1
      %p186 = por %p184, %p185
      %p187 = scmp.ne.s32.totalorder %s176, %s177
      %p188 = scmp.eq.s32.totalorder %s32, 0
      %p189 = por %p187, %p188
      %p190 = scmp.ne.s32.totalorder %s176, %s177
      %p191 = scmp.eq.s32.totalorder %s33, 1
      %p192 = por %p190, %p191
      %p194 = scmp.ne.s32.totalorder %s177, %s193
      %p195 = scmp.eq.s32.totalorder %s33, 0
      %p196 = por %p194, %p195
      %s197 = ssub.s32 %s27, %s34
      %p198 = scmp.eq.s32.totalorder %s197, 0
      %s200 = sadd.s32 %s199, 1
      %s201 = scalar_select %p198, %s199, %s200
      %p204 = pneg %p198
      %p205 = scmp.eq.s32.totalorder %s27, 1
      %p206 = por %p204, %p205
      %p207 = scmp.ne.s32.totalorder %s199, %s202
      %p208 = scmp.eq.s32.totalorder %s27, 0
      %p209 = por %p207, %p208
      %p210 = scmp.ne.s32.totalorder %s199, %s202
      %p211 = scmp.eq.s32.totalorder %s32, 1
      %p212 = por %p210, %p211
      %p213 = scmp.ne.s32.totalorder %s202, %s203
      %p214 = scmp.eq.s32.totalorder %s32, 0
      %p215 = por %p213, %p214
      %p216 = scmp.ne.s32.totalorder %s202, %s203
      %p217 = scmp.eq.s32.totalorder %s33, 1
      %p218 = por %p216, %p217
      %p220 = scmp.ne.s32.totalorder %s203, %s219
      %p221 = scmp.eq.s32.totalorder %s33, 0
      %p222 = por %p220, %p221
      %s223 = ssub.s32 %s27, %s34
      %p224 = scmp.eq.s32.totalorder %s223, 0
      %s226 = sadd.s32 %s225, 1
      %s227 = scalar_select %p224, %s225, %s226
      %p230 = pneg %p224
      %p231 = scmp.eq.s32.totalorder %s27, 1
      %p232 = por %p230, %p231
      %p233 = scmp.ne.s32.totalorder %s225, %s228
      %p234 = scmp.eq.s32.totalorder %s27, 0
      %p235 = por %p233, %p234
      %p236 = scmp.ne.s32.totalorder %s225, %s228
      %p237 = scmp.eq.s32.totalorder %s32, 1
      %p238 = por %p236, %p237
      %p239 = scmp.ne.s32.totalorder %s228, %s229
      %p240 = scmp.eq.s32.totalorder %s32, 0
      %p241 = por %p239, %p240
      %p242 = scmp.ne.s32.totalorder %s228, %s229
      %p243 = scmp.eq.s32.totalorder %s33, 1
      %p244 = por %p242, %p243
      %p246 = scmp.ne.s32.totalorder %s229, %s245
      %p247 = scmp.eq.s32.totalorder %s33, 0
      %p248 = por %p246, %p247
      %s249 = ssub.s32 %s27, %s34
      %p250 = scmp.eq.s32.totalorder %s249, 0
      %s252 = sadd.s32 %s251, 1
      %s253 = scalar_select %p250, %s251, %s252
      %p256 = pneg %p250
      %p257 = scmp.eq.s32.totalorder %s27, 1
      %p258 = por %p256, %p257
      %p259 = scmp.ne.s32.totalorder %s251, %s254
      %p260 = scmp.eq.s32.totalorder %s27, 0
      %p261 = por %p259, %p260
      %p262 = scmp.ne.s32.totalorder %s251, %s254
      %p263 = scmp.eq.s32.totalorder %s32, 1
      %p264 = por %p262, %p263
      %p265 = scmp.ne.s32.totalorder %s254, %s255
      %p266 = scmp.eq.s32.totalorder %s32, 0
      %p267 = por %p265, %p266
      %p268 = scmp.ne.s32.totalorder %s254, %s255
      %p269 = scmp.eq.s32.totalorder %s33, 1
      %p270 = por %p268, %p269
      %p272 = scmp.ne.s32.totalorder %s255, %s271
      %p273 = scmp.eq.s32.totalorder %s33, 0
      %p274 = por %p272, %p273
      %s275 = ssub.s32 %s27, %s34
      %p276 = scmp.eq.s32.totalorder %s275, 0
      %s278 = sadd.s32 %s277, 1
      %s279 = scalar_select %p276, %s277, %s278
      %p282 = pneg %p276
      %p283 = scmp.eq.s32.totalorder %s27, 1
      %p284 = por %p282, %p283
      %p285 = scmp.ne.s32.totalorder %s277, %s280
      %p286 = scmp.eq.s32.totalorder %s27, 0
      %p287 = por %p285, %p286
      %p288 = scmp.ne.s32.totalorder %s277, %s280
      %p289 = scmp.eq.s32.totalorder %s32, 1
      %p290 = por %p288, %p289
      %p291 = scmp.ne.s32.totalorder %s280, %s281
      %p292 = scmp.eq.s32.totalorder %s32, 0
      %p293 = por %p291, %p292
      %p294 = scmp.ne.s32.totalorder %s280, %s281
      %p295 = scmp.eq.s32.totalorder %s33, 1
      %p296 = por %p294, %p295
      %p298 = scmp.ne.s32.totalorder %s281, %s297
      %p299 = scmp.eq.s32.totalorder %s33, 0
      %p300 = por %p298, %p299
      %s301 = ssub.s32 %s27, %s34
      %p302 = scmp.eq.s32.totalorder %s301, 0
      %s304 = sadd.s32 %s303, 1
      %s305 = scalar_select %p302, %s303, %s304
      %p308 = pneg %p302
      %p309 = scmp.eq.s32.totalorder %s27, 1
      %p310 = por %p308, %p309
      %p311 = scmp.ne.s32.totalorder %s303, %s306
      %p312 = scmp.eq.s32.totalorder %s27, 0
      %p313 = por %p311, %p312
      %p314 = scmp.ne.s32.totalorder %s303, %s306
      %p315 = scmp.eq.s32.totalorder %s32, 1
      %p316 = por %p314, %p315
      %p317 = scmp.ne.s32.totalorder %s306, %s307
      %p318 = scmp.eq.s32.totalorder %s32, 0
      %p319 = por %p317, %p318
      %p320 = scmp.ne.s32.totalorder %s306, %s307
      %p321 = scmp.eq.s32.totalorder %s33, 1
      %p322 = por %p320, %p321
      %p324 = scmp.ne.s32.totalorder %s307, %s323
      %p325 = scmp.eq.s32.totalorder %s33, 0
      %p326 = por %p324, %p325
      %s327 = ssub.s32 %s27, %s34
      %p328 = scmp.eq.s32.totalorder %s327, 0
      %s330 = sadd.s32 %s329, 1
      %s331 = scalar_select %p328, %s329, %s330
      %p334 = pneg %p328
      %p335 = scmp.eq.s32.totalorder %s27, 1
      %p336 = por %p334, %p335
      %p337 = scmp.ne.s32.totalorder %s329, %s332
      %p338 = scmp.eq.s32.totalorder %s27, 0
      %p339 = por %p337, %p338
      %p340 = scmp.ne.s32.totalorder %s329, %s332
      %p341 = scmp.eq.s32.totalorder %s32, 1
      %p342 = por %p340, %p341
      %p343 = scmp.ne.s32.totalorder %s332, %s333
      %p344 = scmp.eq.s32.totalorder %s32, 0
      %p345 = por %p343, %p344
      %p346 = scmp.ne.s32.totalorder %s332, %s333
      %p347 = scmp.eq.s32.totalorder %s33, 1
      %p348 = por %p346, %p347
      %p350 = scmp.ne.s32.totalorder %s333, %s349
      %p351 = scmp.eq.s32.totalorder %s33, 0
      %p352 = por %p350, %p351
      %s353 = ssub.s32 %s27, %s34
      %p354 = scmp.eq.s32.totalorder %s353, 0
      %s356 = sadd.s32 %s355, 1
      %s357 = scalar_select %p354, %s355, %s356
      %p360 = pneg %p354
      %p361 = scmp.eq.s32.totalorder %s27, 1
      %p362 = por %p360, %p361
      %p363 = scmp.ne.s32.totalorder %s355, %s358
      %p364 = scmp.eq.s32.totalorder %s27, 0
      %p365 = por %p363, %p364
      %p366 = scmp.ne.s32.totalorder %s355, %s358
      %p367 = scmp.eq.s32.totalorder %s32, 1
      %p368 = por %p366, %p367
      %p369 = scmp.ne.s32.totalorder %s358, %s359
      %p370 = scmp.eq.s32.totalorder %s32, 0
      %p371 = por %p369, %p370
      %p372 = scmp.ne.s32.totalorder %s358, %s359
      %p373 = scmp.eq.s32.totalorder %s33, 1
      %p374 = por %p372, %p373
      %p376 = scmp.ne.s32.totalorder %s359, %s375
      %p377 = scmp.eq.s32.totalorder %s33, 0
      %p378 = por %p376, %p377
      %s379 = ssub.s32 %s27, %s34
      %p380 = scmp.eq.s32.totalorder %s379, 0
      %s382 = sadd.s32 %s381, 1
      %s383 = scalar_select %p380, %s381, %s382
      %p386 = pneg %p380
      %p387 = scmp.eq.s32.totalorder %s27, 1
      %p388 = por %p386, %p387
      %p389 = scmp.ne.s32.totalorder %s381, %s384
      %p390 = scmp.eq.s32.totalorder %s27, 0
      %p391 = por %p389, %p390
      %p392 = scmp.ne.s32.totalorder %s381, %s384
      %p393 = scmp.eq.s32.totalorder %s32, 1
      %p394 = por %p392, %p393
      %p395 = scmp.ne.s32.totalorder %s384, %s385
      %p396 = scmp.eq.s32.totalorder %s32, 0
      %p397 = por %p395, %p396
      %p398 = scmp.ne.s32.totalorder %s384, %s385
      %p399 = scmp.eq.s32.totalorder %s33, 1
      %p400 = por %p398, %p399
      %p402 = scmp.ne.s32.totalorder %s385, %s401
      %p403 = scmp.eq.s32.totalorder %s33, 0
      %p404 = por %p402, %p403
      %s405 = ssub.s32 %s27, %s34
      %p406 = scmp.eq.s32.totalorder %s405, 0
      %s408 = sadd.s32 %s407, 1
      %s409 = scalar_select %p406, %s407, %s408
      %p412 = pneg %p406
      %p413 = scmp.eq.s32.totalorder %s27, 1
      %p414 = por %p412, %p413
      %p415 = scmp.ne.s32.totalorder %s407, %s410
      %p416 = scmp.eq.s32.totalorder %s27, 0
      %p417 = por %p415, %p416
      %p418 = scmp.ne.s32.totalorder %s407, %s410
      %p419 = scmp.eq.s32.totalorder %s32, 1
      %p420 = por %p418, %p419
      %p421 = scmp.ne.s32.totalorder %s410, %s411
      %p422 = scmp.eq.s32.totalorder %s32, 0
      %p423 = por %p421, %p422
      %p424 = scmp.ne.s32.totalorder %s410, %s411
      %p425 = scmp.eq.s32.totalorder %s33, 1
      %p426 = por %p424, %p425
      %p428 = scmp.ne.s32.totalorder %s411, %s427
      %p429 = scmp.eq.s32.totalorder %s33, 0
      %p430 = por %p428, %p429
      %s432 = sadd.s32 %s431, 1
      %p435 = scmp.eq.s32.totalorder %s27, 1
      %p436 = scmp.ne.s32.totalorder %s431, %s433
      %p437 = scmp.eq.s32.totalorder %s27, 0
      %p438 = por %p436, %p437
      %p439 = scmp.ne.s32.totalorder %s431, %s433
      %p440 = scmp.eq.s32.totalorder %s32, 1
      %p441 = por %p439, %p440
      %p442 = scmp.ne.s32.totalorder %s433, %s434
      %p443 = scmp.eq.s32.totalorder %s32, 0
      %p444 = por %p442, %p443
      %p445 = scmp.ne.s32.totalorder %s433, %s434
      %p446 = scmp.eq.s32.totalorder %s33, 1
      %p447 = por %p445, %p446
      %p449 = scmp.ne.s32.totalorder %s434, %s448
      %p450 = scmp.eq.s32.totalorder %s33, 0
      %p451 = por %p449, %p450
      %s453 = sadd.s32 %s452, 1
      %p456 = scmp.eq.s32.totalorder %s27, 1
      %p457 = scmp.ne.s32.totalorder %s452, %s454
      %p458 = scmp.eq.s32.totalorder %s27, 0
      %p459 = por %p457, %p458
      %p460 = scmp.ne.s32.totalorder %s452, %s454
      %p461 = scmp.eq.s32.totalorder %s32, 1
      %p462 = por %p460, %p461
      %p463 = scmp.ne.s32.totalorder %s454, %s455
      %p464 = scmp.eq.s32.totalorder %s32, 0
      %p465 = por %p463, %p464
      %p466 = scmp.ne.s32.totalorder %s454, %s455
      %p467 = scmp.eq.s32.totalorder %s33, 1
      %p468 = por %p466, %p467
      %p470 = scmp.ne.s32.totalorder %s455, %s469
      %p471 = scmp.eq.s32.totalorder %s33, 0
      %p472 = por %p470, %p471
      %s474 = sadd.s32 %s473, 1
      %p477 = scmp.eq.s32.totalorder %s27, 1
      %p478 = scmp.ne.s32.totalorder %s473, %s475
      %p479 = scmp.eq.s32.totalorder %s27, 0
      %p480 = por %p478, %p479
      %p481 = scmp.ne.s32.totalorder %s473, %s475
      %p482 = scmp.eq.s32.totalorder %s32, 1
      %p483 = por %p481, %p482
      %p484 = scmp.ne.s32.totalorder %s475, %s476
      %p485 = scmp.eq.s32.totalorder %s32, 0
      %p486 = por %p484, %p485
      %p487 = scmp.ne.s32.totalorder %s475, %s476
      %p488 = scmp.eq.s32.totalorder %s33, 1
      %p489 = por %p487, %p488
      %p491 = scmp.ne.s32.totalorder %s476, %s490
      %p492 = scmp.eq.s32.totalorder %s33, 0
      %p493 = por %p491, %p492
      %s495 = sadd.s32 %s494, 1
      %p498 = scmp.eq.s32.totalorder %s27, 1
      %p499 = scmp.ne.s32.totalorder %s494, %s496
      %p500 = scmp.eq.s32.totalorder %s27, 0
      %p501 = por %p499, %p500
      %p502 = scmp.ne.s32.totalorder %s494, %s496
      %p503 = scmp.eq.s32.totalorder %s32, 1
      %p504 = por %p502, %p503
      %p505 = scmp.ne.s32.totalorder %s496, %s497
      %p506 = scmp.eq.s32.totalorder %s32, 0
      %p507 = por %p505, %p506
      %p508 = scmp.ne.s32.totalorder %s496, %s497
      %p509 = scmp.eq.s32.totalorder %s33, 1
      %p510 = por %p508, %p509
      %p512 = scmp.ne.s32.totalorder %s497, %s511
      %p513 = scmp.eq.s32.totalorder %s33, 0
      %p514 = por %p512, %p513
      %p515 = scmp.le.s32.totalorder 1, %s27
      %p516 = scmp.lt.s32.totalorder %s27, 3
      %p517 = pnand %p515, %p516
      %p518 = pneg %p517
      // Predicated region
      $region9: #{forward.1} parent=5 // pred_check
        _
      $region10: #{forward.1} parent=5 // pred_check_branch
        %520 = sbr.rel (%p517) target = $region12
      $region11: #{forward.1} parent=5 // pred_region
        %s521 = ssub.s32 %s27, 1
        // Predicated region
        $region13: #{forward.1} parent=11 // pred_check
          %p522 = pneg %p48
        $region14: #{forward.1} parent=11 // pred_check_branch
          %524 = sbr.rel (%p522) target = $region16
        $region15: #{forward.1} parent=11 // pred_region
          _
        $region16: #{forward.1} parent=11 // pred_fallthru
          _
        // Predicated region
        $region17: #{forward.1} parent=11 // pred_check
          %p525 = pneg %p69
        $region18: #{forward.1} parent=11 // pred_check_branch
          %527 = sbr.rel (%p525) target = $region20
        $region19: #{forward.1} parent=11 // pred_region
          _
        $region20: #{forward.1} parent=11 // pred_fallthru
          _
        // Predicated region
        $region21: #{forward.1} parent=11 // pred_check
          %p528 = pneg %p90
        $region22: #{forward.1} parent=11 // pred_check_branch
          %530 = sbr.rel (%p528) target = $region24
        $region23: #{forward.1} parent=11 // pred_region
          _
        $region24: #{forward.1} parent=11 // pred_fallthru
          _
        // Predicated region
        $region25: #{forward.1} parent=11 // pred_check
          %p531 = pneg %p111
        $region26: #{forward.1} parent=11 // pred_check_branch
          %533 = sbr.rel (%p531) target = $region28
        $region27: #{forward.1} parent=11 // pred_region
          _
        $region28: #{forward.1} parent=11 // pred_fallthru
          _
        // Predicated region
        $region29: #{forward.1} parent=11 // pred_check
          %p534 = pneg %p444
        $region30: #{forward.1} parent=11 // pred_check_branch
          %536 = sbr.rel (%p534) target = $region32
        $region31: #{forward.1} parent=11 // pred_region
          _
        $region32: #{forward.1} parent=11 // pred_fallthru
          _
        // Predicated region
        $region33: #{forward.1} parent=11 // pred_check
          %p537 = pneg %p465
        $region34: #{forward.1} parent=11 // pred_check_branch
          %539 = sbr.rel (%p537) target = $region36
        $region35: #{forward.1} parent=11 // pred_region
          _
        $region36: #{forward.1} parent=11 // pred_fallthru
          _
      $region12: #{forward.1} parent=5 // pred_fallthru
        _
      %p540 = scmp.lt.s32.totalorder %s27, 2
      // Predicated region
      $region37: #{forward.1} parent=5 // pred_check
        %p541 = pneg %p540
      $region38: #{forward.1} parent=5 // pred_check_branch
        %543 = sbr.rel (%p541) target = $region40
      $region39: #{forward.1} parent=5 // pred_region
        // Predicated region
        $region41: #{forward.1} parent=39 // pred_check
          %p544 = pneg %p131
        $region42: #{forward.1} parent=39 // pred_check_branch
          %546 = sbr.rel (%p544) target = $region44
        $region43: #{forward.1} parent=39 // pred_region
          %p547 = scmp.lt.s32.totalorder %s27, 1
          %s548 = scalar_select %p547, %s27, 1
          %s549 = smul.addr %s548, 4
          %s550 = smul.addr %s549, 8
          %s551 = scalar_lea.vmem %s4, %s550
        $region44: #{forward.1} parent=39 // pred_fallthru
          _
        // Predicated region
        $region45: #{forward.1} parent=39 // pred_check
          %p552 = pneg %p157
        $region46: #{forward.1} parent=39 // pred_check_branch
          %554 = sbr.rel (%p552) target = $region48
        $region47: #{forward.1} parent=39 // pred_region
          %p555 = scmp.lt.s32.totalorder %s27, 1
          %s556 = scalar_select %p555, %s27, 1
          %s557 = scalar_lea.vmem %s5, %s556
        $region48: #{forward.1} parent=39 // pred_fallthru
          _
        // Predicated region
        $region49: #{forward.1} parent=39 // pred_check
          %p558 = pneg %p183
        $region50: #{forward.1} parent=39 // pred_check_branch
          %560 = sbr.rel (%p558) target = $region52
        $region51: #{forward.1} parent=39 // pred_region
          %p561 = scmp.lt.s32.totalorder %s27, 1
          %s562 = scalar_select %p561, %s27, 1
          %s563 = smul.addr %s562, 4
          %s564 = smul.addr %s563, 8
          %s565 = scalar_lea.vmem %s6, %s564
        $region52: #{forward.1} parent=39 // pred_fallthru
          _
        // Predicated region
        $region53: #{forward.1} parent=39 // pred_check
          %p566 = pneg %p209
        $region54: #{forward.1} parent=39 // pred_check_branch
          %568 = sbr.rel (%p566) target = $region56
        $region55: #{forward.1} parent=39 // pred_region
          %p569 = scmp.lt.s32.totalorder %s27, 1
          %s570 = scalar_select %p569, %s27, 1
          %s571 = scalar_lea.vmem %s7, %s570
        $region56: #{forward.1} parent=39 // pred_fallthru
          _
        // Predicated region
        $region57: #{forward.1} parent=39 // pred_check
          %p572 = pneg %p235
        $region58: #{forward.1} parent=39 // pred_check_branch
          %574 = sbr.rel (%p572) target = $region60
        $region59: #{forward.1} parent=39 // pred_region
          %p575 = scmp.lt.s32.totalorder %s27, 1
          %s576 = scalar_select %p575, %s27, 1
          %s577 = scalar_lea.vmem %s8, %s576
        $region60: #{forward.1} parent=39 // pred_fallthru
          _
        // Predicated region
        $region61: #{forward.1} parent=39 // pred_check
          %p578 = pneg %p261
        $region62: #{forward.1} parent=39 // pred_check_branch
          %580 = sbr.rel (%p578) target = $region64
        $region63: #{forward.1} parent=39 // pred_region
          %p581 = scmp.lt.s32.totalorder %s27, 1
          %s582 = scalar_select %p581, %s27, 1
          %s583 = scalar_lea.vmem %s9, %s582
        $region64: #{forward.1} parent=39 // pred_fallthru
          _
        // Predicated region
        $region65: #{forward.1} parent=39 // pred_check
          %p584 = pneg %p287
        $region66: #{forward.1} parent=39 // pred_check_branch
          %586 = sbr.rel (%p584) target = $region68
        $region67: #{forward.1} parent=39 // pred_region
          %p587 = scmp.lt.s32.totalorder %s27, 1
          %s588 = scalar_select %p587, %s27, 1
          %s589 = smul.addr %s588, 4
          %s590 = smul.addr %s589, 8
          %s591 = scalar_lea.vmem %s10, %s590
        $region68: #{forward.1} parent=39 // pred_fallthru
          _
        // Predicated region
        $region69: #{forward.1} parent=39 // pred_check
          %p592 = pneg %p313
        $region70: #{forward.1} parent=39 // pred_check_branch
          %594 = sbr.rel (%p592) target = $region72
        $region71: #{forward.1} parent=39 // pred_region
          %p595 = scmp.lt.s32.totalorder %s27, 1
          %s596 = scalar_select %p595, %s27, 1
          %s597 = scalar_lea.vmem %s11, %s596
        $region72: #{forward.1} parent=39 // pred_fallthru
          _
        // Predicated region
        $region73: #{forward.1} parent=39 // pred_check
          %p598 = pneg %p339
        $region74: #{forward.1} parent=39 // pred_check_branch
          %600 = sbr.rel (%p598) target = $region76
        $region75: #{forward.1} parent=39 // pred_region
          %p601 = scmp.lt.s32.totalorder %s27, 1
          %s602 = scalar_select %p601, %s27, 1
          %s603 = smul.addr %s602, 8
          %s604 = smul.addr %s603, 8
          %s605 = scalar_lea.vmem %s12, %s604
        $region76: #{forward.1} parent=39 // pred_fallthru
          _
        // Predicated region
        $region77: #{forward.1} parent=39 // pred_check
          %p606 = pneg %p365
        $region78: #{forward.1} parent=39 // pred_check_branch
          %608 = sbr.rel (%p606) target = $region80
        $region79: #{forward.1} parent=39 // pred_region
          %p609 = scmp.lt.s32.totalorder %s27, 1
          %s610 = scalar_select %p609, %s27, 1
          %s611 = scalar_lea.vmem %s13, %s610
        $region80: #{forward.1} parent=39 // pred_fallthru
          _
        // Predicated region
        $region81: #{forward.1} parent=39 // pred_check
          %p612 = pneg %p391
        $region82: #{forward.1} parent=39 // pred_check_branch
          %614 = sbr.rel (%p612) target = $region84
        $region83: #{forward.1} parent=39 // pred_region
          %p615 = scmp.lt.s32.totalorder %s27, 1
          %s616 = scalar_select %p615, %s27, 1
          %s617 = scalar_lea.vmem %s14, %s616
        $region84: #{forward.1} parent=39 // pred_fallthru
          _
        // Predicated region
        $region85: #{forward.1} parent=39 // pred_check
          %p618 = pneg %p417
        $region86: #{forward.1} parent=39 // pred_check_branch
          %620 = sbr.rel (%p618) target = $region88
        $region87: #{forward.1} parent=39 // pred_region
          %p621 = scmp.lt.s32.totalorder %s27, 1
          %s622 = scalar_select %p621, %s27, 1
          %s623 = scalar_lea.vmem %s15, %s622
        $region88: #{forward.1} parent=39 // pred_fallthru
          _
      $region40: #{forward.1} parent=5 // pred_fallthru
        _
      %p624 = scmp.le.s32.totalorder 1, %s27
      %p625 = scmp.lt.s32.totalorder %s27, 3
      %p626 = pnand %p624, %p625
      %p627 = pneg %p626
      // Predicated region
      $region89: #{forward.1} parent=5 // pred_check
        _
      $region90: #{forward.1} parent=5 // pred_check_branch
        %629 = sbr.rel (%p626) target = $region92
      $region91: #{forward.1} parent=5 // pred_region
        %s630 = ssub.s32 %s27, 1
        %p631 = pneg %p48
        %p632 = pneg %p45
        %p633 = pneg %p69
        %p634 = pneg %p66
        %p635 = pneg %p90
        %p636 = pneg %p87
        %p637 = pneg %p111
        %p638 = pneg %p108
        %p639 = scmp.lt.s32.totalorder %s32, 1
        %s640 = scalar_select %p639, %s32, 1
        %s641 = smul.addr %s640, 4
        %s642 = smul.addr %s641, 8
        %s643 = scalar_lea.vmem %s4, %s642
        %p644 = pneg %p137
        %p645 = pneg %p134
        %p646 = scmp.lt.s32.totalorder %s32, 1
        %s647 = scalar_select %p646, %s32, 1
        %s648 = scalar_lea.vmem %s5, %s647
        %p649 = pneg %p163
        %p650 = pneg %p160
        %p651 = scmp.lt.s32.totalorder %s32, 1
        %s652 = scalar_select %p651, %s32, 1
        %s653 = smul.addr %s652, 4
        %s654 = smul.addr %s653, 8
        %s655 = scalar_lea.vmem %s6, %s654
        %p656 = pneg %p189
        %p657 = pneg %p186
        %p658 = scmp.lt.s32.totalorder %s32, 1
        %s659 = scalar_select %p658, %s32, 1
        %s660 = scalar_lea.vmem %s7, %s659
        %p661 = pneg %p215
        %p662 = pneg %p212
        %p663 = scmp.lt.s32.totalorder %s32, 1
        %s664 = scalar_select %p663, %s32, 1
        %s665 = scalar_lea.vmem %s8, %s664
        %p666 = pneg %p241
        %p667 = pneg %p238
        %p668 = scmp.lt.s32.totalorder %s32, 1
        %s669 = scalar_select %p668, %s32, 1
        %s670 = scalar_lea.vmem %s9, %s669
        %p671 = pneg %p267
        %p672 = pneg %p264
        %p673 = scmp.lt.s32.totalorder %s32, 1
        %s674 = scalar_select %p673, %s32, 1
        %s675 = smul.addr %s674, 4
        %s676 = smul.addr %s675, 8
        %s677 = scalar_lea.vmem %s10, %s676
        %p678 = pneg %p293
        %p679 = pneg %p290
        %p680 = scmp.lt.s32.totalorder %s32, 1
        %s681 = scalar_select %p680, %s32, 1
        %s682 = scalar_lea.vmem %s11, %s681
        %p683 = pneg %p319
        %p684 = pneg %p316
        %p685 = scmp.lt.s32.totalorder %s32, 1
        %s686 = scalar_select %p685, %s32, 1
        %s687 = smul.addr %s686, 8
        %s688 = smul.addr %s687, 8
        %s689 = scalar_lea.vmem %s12, %s688
        %p690 = pneg %p345
        %p691 = pneg %p342
        %p692 = scmp.lt.s32.totalorder %s32, 1
        %s693 = scalar_select %p692, %s32, 1
        %s694 = scalar_lea.vmem %s13, %s693
        %p695 = pneg %p371
        %p696 = pneg %p368
        %p697 = scmp.lt.s32.totalorder %s32, 1
        %s698 = scalar_select %p697, %s32, 1
        %s699 = scalar_lea.vmem %s14, %s698
        %p700 = pneg %p397
        %p701 = pneg %p394
        %p702 = scmp.lt.s32.totalorder %s32, 1
        %s703 = scalar_select %p702, %s32, 1
        %s704 = scalar_lea.vmem %s15, %s703
        %p705 = pneg %p423
        %p706 = pneg %p420
        %p707 = pneg %p444
        %p708 = pneg %p441
        %p709 = pneg %p465
        %p710 = pneg %p462
        %p711 = pneg %p486
        %p712 = pneg %p483
        %p713 = pneg %p507
        %p714 = pneg %p504
        %p715 = scmp.lt.s32.totalorder %s32, 1
        %s716 = scalar_select %p715, %s32, 1
        %s717 = smul.addr %s716, 4
        %s718 = smul.addr %s717, 8
        %s719 = scalar_lea.vmem %s4, %s718
        %p720 = scmp.lt.s32.totalorder %s32, 1
        %s721 = scalar_select %p720, %s32, 1
        %s722 = scalar_lea.vmem %s5, %s721
        %p723 = scmp.lt.s32.totalorder %s32, 1
        %s724 = scalar_select %p723, %s32, 1
        %s725 = smul.addr %s724, 4
        %s726 = smul.addr %s725, 8
        %s727 = scalar_lea.vmem %s6, %s726
        %p728 = scmp.lt.s32.totalorder %s32, 1
        %s729 = scalar_select %p728, %s32, 1
        %s730 = scalar_lea.vmem %s7, %s729
        %p731 = scmp.lt.s32.totalorder %s32, 1
        %s732 = scalar_select %p731, %s32, 1
        %s733 = scalar_lea.vmem %s8, %s732
        %p734 = scmp.lt.s32.totalorder %s32, 1
        %s735 = scalar_select %p734, %s32, 1
        %s736 = scalar_lea.vmem %s9, %s735
        %p737 = scmp.lt.s32.totalorder %s32, 1
        %s738 = scalar_select %p737, %s32, 1
        %s739 = smul.addr %s738, 4
        %s740 = smul.addr %s739, 8
        %s741 = scalar_lea.vmem %s10, %s740
        %p742 = scmp.lt.s32.totalorder %s32, 1
        %s743 = scalar_select %p742, %s32, 1
        %s744 = scalar_lea.vmem %s11, %s743
        %p745 = scmp.lt.s32.totalorder %s32, 1
        %s746 = scalar_select %p745, %s32, 1
        %s747 = smul.addr %s746, 8
        %s748 = smul.addr %s747, 8
        %s749 = scalar_lea.vmem %s12, %s748
        %p750 = scmp.lt.s32.totalorder %s32, 1
        %s751 = scalar_select %p750, %s32, 1
        %s752 = scalar_lea.vmem %s13, %s751
        %p753 = scmp.lt.s32.totalorder %s32, 1
        %s754 = scalar_select %p753, %s32, 1
        %s755 = scalar_lea.vmem %s14, %s754
        %p756 = scmp.lt.s32.totalorder %s32, 1
        %s757 = scalar_select %p756, %s32, 1
        %s758 = scalar_lea.vmem %s15, %s757
        %p759 = scmp.eq.s32.totalorder %s32, 0
        // Predicated region
        $region93: #{forward.1} parent=91 // pred_check
          %p760 = pneg %p759
        $region94: #{forward.1} parent=91 // pred_check_branch
          %762 = sbr.rel (%p760) target = $region96
        $region95: #{forward.1} parent=91 // pred_region
          %v763 = vld [vmem:[%s0] sm:$0xff]
          %v764 = vld [vmem:[%s0 + $0x8] sm:$0xff]
          %vm765 = vcmask 261120
          %766 = vst.msk [vmem:[#allocation2] sm:$0xff] %vm765, %v763
          %767 = vst.msk [vmem:[#allocation2 + $0x8] sm:$0xff] %vm765, %v764
        $region96: #{forward.1} parent=91 // pred_fallthru
          _
        %v768 = vld [vmem:[#allocation2] sm:$0xff]
        %v769 = vld [vmem:[#allocation2 + $0x8] sm:$0xff]
        %v770 = vld [vmem:[%s1] sm:$0x1]
        %v771 = vld [vmem:[%s1 + $0x1] sm:$0x1]
        %v772 = vld [vmem:[%s719] sm:$0xff]
        %v773 = vld [vmem:[%s719 + $0x8] sm:$0xff]
        %v774 = vld [vmem:[%s719 + $0x10] sm:$0xff]
        %v775 = vld [vmem:[%s719 + $0x18] sm:$0xff]
        %v776 = vld [vmem:[%s722] sm:$0x1]
        %v778 = vlaneseq
        %v779 = vshrl.u32 %v778, 7
        %v780 = vsub.s32 0, %v779
        %v781 = vrot.slane %v776, %v780
        %vm783 = vcmask 261120
        %v785 = vsel %vm783, %v768, 0
        %v788 = vsel %vm783, %v769, 0
        %790 = vmatprep.subr.mxu0 0.0
        %791 = vmatpush1.msra.mxu0 %v772
        %792 = vmatprep.subr.mxu0 0.0
        %793 = vmatpush1.msra.mxu0 %v773
        %794 = vmatprep.subr.mxu0 0.0
        %795 = vmatpush1.msra.mxu0 %v774
        %796 = vmatprep.subr.mxu0 0.0
        %797 = vmatpush1.msra.mxu0 %v775
        %798 = vmatprep.subr.mxu0 0.0
        %799 = vmatpush1.msra.mxu0 0.0
        %800 = vmatprep.subr.mxu0 0.0
        %801 = vmatpush1.msra.mxu0 0.0
        %802 = vmatprep.subr.mxu0 0.0
        %803 = vmatpush1.msra.mxu0 0.0
        %804 = vmatprep.subr.mxu0 0.0
        %805 = vmatpush1.msra.mxu0 0.0
        %806 = vmatprep.subr.mxu0 0.0
        %807 = vmatpush1.msra.mxu0 0.0
        %808 = vmatprep.subr.mxu0 0.0
        %809 = vmatpush1.msra.mxu0 0.0
        %810 = vmatprep.subr.mxu0 0.0
        %811 = vmatpush1.msra.mxu0 0.0
        %812 = vmatprep.subr.mxu0 0.0
        %813 = vmatpush1.msra.mxu0 0.0
        %814 = vmatprep.subr.mxu0 0.0
        %815 = vmatpush1.msra.mxu0 0.0
        %816 = vmatprep.subr.mxu0 0.0
        %817 = vmatpush1.msra.mxu0 0.0
        %818 = vmatprep.subr.mxu0 0.0
        %819 = vmatpush1.msra.mxu0 0.0
        %820 = vmatprep.subr.mxu0 0.0
        %821 = vmatpush1.msra.mxu0 0.0
        %822 = vmatprep.subr.mxu0 0.0
        %823 = vmatpush1.msra.mxu0 0.0
        %824 = vmatprep.subr.mxu0 0.0
        %825 = vmatpush1.msra.mxu0 0.0
        %826 = vmatprep.subr.mxu0 0.0
        %827 = vmatpush1.msra.mxu0 0.0
        %828 = vmatprep.subr.mxu0 0.0
        %829 = vmatpush1.msra.mxu0 0.0
        %830 = vmatprep.subr.mxu0 0.0
        %831 = vmatpush1.msra.mxu0 0.0
        %832 = vmatprep.subr.mxu0 0.0
        %833 = vmatpush1.msra.mxu0 0.0
        %834 = vmatprep.subr.mxu0 0.0
        %835 = vmatpush1.msra.mxu0 0.0
        %836 = vmatprep.subr.mxu0 0.0
        %837 = vmatpush1.msra.mxu0 0.0
        %838 = vmatprep.subr.mxu0 0.0
        %839 = vmatpush1.msra.mxu0 0.0
        %840 = vmatprep.subr.mxu0 0.0
        %841 = vmatpush1.msra.mxu0 0.0
        %842 = vmatprep.subr.mxu0 0.0
        %843 = vmatpush1.msra.mxu0 0.0
        %844 = vmatprep.subr.mxu0 0.0
        %845 = vmatpush1.msra.mxu0 0.0
        %846 = vmatprep.subr.mxu0 0.0
        %847 = vmatpush1.msra.mxu0 0.0
        %848 = vmatprep.subr.mxu0 0.0
        %849 = vmatpush1.msra.mxu0 0.0
        %850 = vmatprep.subr.mxu0 0.0
        %851 = vmatpush1.msra.mxu0 0.0
        %852 = vmatprep.subr.mxu0 0.0
        %853 = vmatpush1.msra.mxu0 0.0
        %854 = vmatprep.mubr.f32.mxu0 0.0
        %855 = vmatmul.mubr.f32.gmra.mrb[0].mxu0 %v785
        %v856 = vpop.f32.mrb[0].mxu0
        %v857 = vadd.f32 %v781, %v856
        %v858 = vpop.f32.mrb[0].mxu0
        %859 = vmatprep.mubr.f32.mxu0 0.0
        %860 = vmatmul.mubr.f32.gmra.mrb[0].mxu0 %v788
        %v861 = vpop.f32.mrb[0].mxu0
        %v862 = vadd.f32 %v781, %v861
        %v863 = vpop.f32.mrb[0].mxu0
        %864 = vdwg.mxu0
        %866 = vrot.lane.b32.xlu0 %v857, 96
        %v867 = vpop.permute.xlu0 %866
        %vm868 = vcmask 130048
        %v869 = vsel %vm868, %v857, 0
        %v871 = vsel %vm868, %v867, 0
        %873 = vmatprep.subr.mxu0 0.0
        %874 = vmatpush1.xpose.msra.mxu0 %v871
        %875 = vmatprep.subr.mxu0 0.0
        %876 = vmatpush1.xpose.msra.mxu0 0.0
        %877 = vmatprep.subr.mxu0 0.0
        %878 = vmatpush1.xpose.msra.mxu0 0.0
        %879 = vmatprep.subr.mxu0 0.0
        %880 = vmatpush1.xpose.msra.mxu0 0.0
        %881 = vmatprep.subr.mxu0 0.0
        %882 = vmatpush1.xpose.msra.mxu0 0.0
        %883 = vmatprep.subr.mxu0 0.0
        %884 = vmatpush1.xpose.msra.mxu0 0.0
        %885 = vmatprep.subr.mxu0 0.0
        %886 = vmatpush1.xpose.msra.mxu0 0.0
        %887 = vmatprep.subr.mxu0 0.0
        %888 = vmatpush1.xpose.msra.mxu0 0.0
        %889 = vmatprep.subr.mxu0 0.0
        %890 = vmatpush1.xpose.msra.mxu0 0.0
        %891 = vmatprep.subr.mxu0 0.0
        %892 = vmatpush1.xpose.msra.mxu0 0.0
        %893 = vmatprep.subr.mxu0 0.0
        %894 = vmatpush1.xpose.msra.mxu0 0.0
        %895 = vmatprep.subr.mxu0 0.0
        %896 = vmatpush1.xpose.msra.mxu0 0.0
        %897 = vmatprep.subr.mxu0 0.0
        %898 = vmatpush1.xpose.msra.mxu0 0.0
        %899 = vmatprep.subr.mxu0 0.0
        %900 = vmatpush1.xpose.msra.mxu0 0.0
        %901 = vmatprep.subr.mxu0 0.0
        %902 = vmatpush1.xpose.msra.mxu0 0.0
        %903 = vmatprep.subr.mxu0 0.0
        %904 = vmatpush1.xpose.msra.mxu0 0.0
        %905 = vmatprep.subr.mxu0 0.0
        %906 = vmatpush1.xpose.msra.mxu0 0.0
        %907 = vmatprep.subr.mxu0 0.0
        %908 = vmatpush1.xpose.msra.mxu0 0.0
        %909 = vmatprep.subr.mxu0 0.0
        %910 = vmatpush1.xpose.msra.mxu0 0.0
        %911 = vmatprep.subr.mxu0 0.0
        %912 = vmatpush1.xpose.msra.mxu0 0.0
        %913 = vmatprep.subr.mxu0 0.0
        %914 = vmatpush1.xpose.msra.mxu0 0.0
        %915 = vmatprep.subr.mxu0 0.0
        %916 = vmatpush1.xpose.msra.mxu0 0.0
        %917 = vmatprep.subr.mxu0 0.0
        %918 = vmatpush1.xpose.msra.mxu0 0.0
        %919 = vmatprep.subr.mxu0 0.0
        %920 = vmatpush1.xpose.msra.mxu0 0.0
        %921 = vmatprep.subr.mxu0 0.0
        %922 = vmatpush1.xpose.msra.mxu0 0.0
        %923 = vmatprep.subr.mxu0 0.0
        %924 = vmatpush1.xpose.msra.mxu0 0.0
        %925 = vmatprep.subr.mxu0 0.0
        %926 = vmatpush1.xpose.msra.mxu0 0.0
        %927 = vmatprep.subr.mxu0 0.0
        %928 = vmatpush1.xpose.msra.mxu0 0.0
        %929 = vmatprep.subr.mxu0 0.0
        %930 = vmatpush1.xpose.msra.mxu0 0.0
        %931 = vmatprep.subr.mxu0 0.0
        %932 = vmatpush1.xpose.msra.mxu0 0.0
        %933 = vmatprep.subr.mxu0 0.0
        %934 = vmatpush1.xpose.msra.mxu0 0.0
        %935 = vmatprep.subr.mxu0 0.0
        %936 = vmatpush1.xpose.msra.mxu0 0.0
        %937 = vmatprep.mubr.f32.mxu0 0.0
        %938 = vmatmul.mubr.f32.gmra.mrb[0].mxu0 %v869
        %v939 = vpop.f32.mrb[0].mxu0
        %v940 = vadd.f32 0.0, %v939
        %v941 = vpop.f32.mrb[0].mxu0
        %942 = vdwg.mxu0
        %944 = vrot.lane.b32.xlu0 %v862, 96
        %v945 = vpop.permute.xlu0 %944
        %v946 = vsel %vm868, %v862, 0
        %v948 = vsel %vm868, %v945, 0
        %950 = vmatprep.subr.mxu0 0.0
        %951 = vmatpush1.xpose.msra.mxu0 %v948
        %952 = vmatprep.subr.mxu0 0.0
        %953 = vmatpush1.xpose.msra.mxu0 0.0
        %954 = vmatprep.subr.mxu0 0.0
        %955 = vmatpush1.xpose.msra.mxu0 0.0
        %956 = vmatprep.subr.mxu0 0.0
        %957 = vmatpush1.xpose.msra.mxu0 0.0
        %958 = vmatprep.subr.mxu0 0.0
        %959 = vmatpush1.xpose.msra.mxu0 0.0
        %960 = vmatprep.subr.mxu0 0.0
        %961 = vmatpush1.xpose.msra.mxu0 0.0
        %962 = vmatprep.subr.mxu0 0.0
        %963 = vmatpush1.xpose.msra.mxu0 0.0
        %964 = vmatprep.subr.mxu0 0.0
        %965 = vmatpush1.xpose.msra.mxu0 0.0
        %966 = vmatprep.subr.mxu0 0.0
        %967 = vmatpush1.xpose.msra.mxu0 0.0
        %968 = vmatprep.subr.mxu0 0.0
        %969 = vmatpush1.xpose.msra.mxu0 0.0
        %970 = vmatprep.subr.mxu0 0.0
        %971 = vmatpush1.xpose.msra.mxu0 0.0
        %972 = vmatprep.subr.mxu0 0.0
        %973 = vmatpush1.xpose.msra.mxu0 0.0
        %974 = vmatprep.subr.mxu0 0.0
        %975 = vmatpush1.xpose.msra.mxu0 0.0
        %976 = vmatprep.subr.mxu0 0.0
        %977 = vmatpush1.xpose.msra.mxu0 0.0
        %978 = vmatprep.subr.mxu0 0.0
        %979 = vmatpush1.xpose.msra.mxu0 0.0
        %980 = vmatprep.subr.mxu0 0.0
        %981 = vmatpush1.xpose.msra.mxu0 0.0
        %982 = vmatprep.subr.mxu0 0.0
        %983 = vmatpush1.xpose.msra.mxu0 0.0
        %984 = vmatprep.subr.mxu0 0.0
        %985 = vmatpush1.xpose.msra.mxu0 0.0
        %986 = vmatprep.subr.mxu0 0.0
        %987 = vmatpush1.xpose.msra.mxu0 0.0
        %988 = vmatprep.subr.mxu0 0.0
        %989 = vmatpush1.xpose.msra.mxu0 0.0
        %990 = vmatprep.subr.mxu0 0.0
        %991 = vmatpush1.xpose.msra.mxu0 0.0
        %992 = vmatprep.subr.mxu0 0.0
        %993 = vmatpush1.xpose.msra.mxu0 0.0
        %994 = vmatprep.subr.mxu0 0.0
        %995 = vmatpush1.xpose.msra.mxu0 0.0
        %996 = vmatprep.subr.mxu0 0.0
        %997 = vmatpush1.xpose.msra.mxu0 0.0
        %998 = vmatprep.subr.mxu0 0.0
        %999 = vmatpush1.xpose.msra.mxu0 0.0
        %1000 = vmatprep.subr.mxu0 0.0
        %1001 = vmatpush1.xpose.msra.mxu0 0.0
        %1002 = vmatprep.subr.mxu0 0.0
        %1003 = vmatpush1.xpose.msra.mxu0 0.0
        %1004 = vmatprep.subr.mxu0 0.0
        %1005 = vmatpush1.xpose.msra.mxu0 0.0
        %1006 = vmatprep.subr.mxu0 0.0
        %1007 = vmatpush1.xpose.msra.mxu0 0.0
        %1008 = vmatprep.subr.mxu0 0.0
        %1009 = vmatpush1.xpose.msra.mxu0 0.0
        %1010 = vmatprep.subr.mxu0 0.0
        %1011 = vmatpush1.xpose.msra.mxu0 0.0
        %1012 = vmatprep.subr.mxu0 0.0
        %1013 = vmatpush1.xpose.msra.mxu0 0.0
        %1014 = vmatprep.mubr.f32.mxu0 0.0
        %1015 = vmatmul.mubr.f32.gmra.mrb[0].mxu0 %v946
        %v1016 = vpop.f32.mrb[0].mxu0
        %v1017 = vadd.f32 0.0, %v1016
        %v1018 = vpop.f32.mrb[0].mxu0
        %1019 = vdwg.mxu0
        %v1020 = vmul.f32 %v940, 0.25
        %v1021 = vmul.f32 %v1017, 0.25
        %v1024 = vlaneseq
        %v1025 = vshrl.u32 %v1024, 7
        %v1026 = vsub.s32 0, %v1025
        %v1027 = vrot.slane %v770, %v1026
        %v1028 = vlaneseq
        %v1029 = vshrl.u32 %v1028, 7
        %v1030 = vsub.s32 0, %v1029
        %v1031 = vrot.slane %v771, %v1030
        %v1034 = vadd.f32 %v1020, %v1027
        %v1035 = vadd.f32 %v1021, %v1031
        %vm1036 = vcmask 64512
        %v1037 = vsel %vm1036, %v1034, -inf
        %1038 = vmax.xlane.f32.xlu0 %v1037
        %v1039 = vpop.xlane.xlu0 %1038
        %v1040 = vsel %vm1036, %v1035, -inf
        %1041 = vmax.xlane.f32.xlu0 %v1040
        %v1042 = vpop.xlane.xlu0 %1041
        %v1043 = vsub.f32 %v1034, %v1039
        %v1044 = vsub.f32 %v1035, %v1042
        %v1045 = vmul.f32 %v1043, 1.442695
        %v1046 = vpow.pop %v1045
        %v1047 = vmul.f32 %v1044, 1.442695
        %v1048 = vpow.pop %v1047
        %v1049 = vsel %vm1036, %v1046, 0.0
        %1050 = vadd.xlane.f32.xlu0 %v1049
        %v1051 = vpop.xlane.xlu0 %1050
        %v1052 = vsel %vm1036, %v1048, 0.0
        %1053 = vadd.xlane.f32.xlu0 %v1052
        %v1054 = vpop.xlane.xlu0 %1053
        %v1055 = vrcp.pop %v1051
        %v1056 = vrcp.pop %v1054
        %v1057 = vmul.f32 %v1046, %v1055
        %v1058 = vmul.f32 %v1048, %v1056
        %1059 = vrot.lane.b32.xlu0 %v857, 64
        %v1060 = vpop.permute.xlu0 %1059
        %v1063 = vsel %vm1036, %v1057, 0
        %1065 = vmatprep.subr.mxu0 0.0
        %1066 = vmatpush1.msra.mxu0 %v1060
        %1067 = vmatprep.subr.mxu0 0.0
        %1068 = vmatpush1.msra.mxu0 0.0
        %1069 = vmatprep.subr.mxu0 0.0
        %1070 = vmatpush1.msra.mxu0 0.0
        %1071 = vmatprep.subr.mxu0 0.0
        %1072 = vmatpush1.msra.mxu0 0.0
        %1073 = vmatprep.subr.mxu0 0.0
        %1074 = vmatpush1.msra.mxu0 0.0
        %1075 = vmatprep.subr.mxu0 0.0
        %1076 = vmatpush1.msra.mxu0 0.0
        %1077 = vmatprep.subr.mxu0 0.0
        %1078 = vmatpush1.msra.mxu0 0.0
        %1079 = vmatprep.subr.mxu0 0.0
        %1080 = vmatpush1.msra.mxu0 0.0
        %1081 = vmatprep.subr.mxu0 0.0
        %1082 = vmatpush1.msra.mxu0 0.0
        %1083 = vmatprep.subr.mxu0 0.0
        %1084 = vmatpush1.msra.mxu0 0.0
        %1085 = vmatprep.subr.mxu0 0.0
        %1086 = vmatpush1.msra.mxu0 0.0
        %1087 = vmatprep.subr.mxu0 0.0
        %1088 = vmatpush1.msra.mxu0 0.0
        %1089 = vmatprep.subr.mxu0 0.0
        %1090 = vmatpush1.msra.mxu0 0.0
        %1091 = vmatprep.subr.mxu0 0.0
        %1092 = vmatpush1.msra.mxu0 0.0
        %1093 = vmatprep.subr.mxu0 0.0
        %1094 = vmatpush1.msra.mxu0 0.0
        %1095 = vmatprep.subr.mxu0 0.0
        %1096 = vmatpush1.msra.mxu0 0.0
        %1097 = vmatprep.subr.mxu0 0.0
        %1098 = vmatpush1.msra.mxu0 0.0
        %1099 = vmatprep.subr.mxu0 0.0
        %1100 = vmatpush1.msra.mxu0 0.0
        %1101 = vmatprep.subr.mxu0 0.0
        %1102 = vmatpush1.msra.mxu0 0.0
        %1103 = vmatprep.subr.mxu0 0.0
        %1104 = vmatpush1.msra.mxu0 0.0
        %1105 = vmatprep.subr.mxu0 0.0
        %1106 = vmatpush1.msra.mxu0 0.0
        %1107 = vmatprep.subr.mxu0 0.0
        %1108 = vmatpush1.msra.mxu0 0.0
        %1109 = vmatprep.subr.mxu0 0.0
        %1110 = vmatpush1.msra.mxu0 0.0
        %1111 = vmatprep.subr.mxu0 0.0
        %1112 = vmatpush1.msra.mxu0 0.0
        %1113 = vmatprep.subr.mxu0 0.0
        %1114 = vmatpush1.msra.mxu0 0.0
        %1115 = vmatprep.subr.mxu0 0.0
        %1116 = vmatpush1.msra.mxu0 0.0
        %1117 = vmatprep.subr.mxu0 0.0
        %1118 = vmatpush1.msra.mxu0 0.0
        %1119 = vmatprep.subr.mxu0 0.0
        %1120 = vmatpush1.msra.mxu0 0.0
        %1121 = vmatprep.subr.mxu0 0.0
        %1122 = vmatpush1.msra.mxu0 0.0
        %1123 = vmatprep.subr.mxu0 0.0
        %1124 = vmatpush1.msra.mxu0 0.0
        %1125 = vmatprep.subr.mxu0 0.0
        %1126 = vmatpush1.msra.mxu0 0.0
        %1127 = vmatprep.subr.mxu0 0.0
        %1128 = vmatpush1.msra.mxu0 0.0
        %1129 = vmatprep.mubr.f32.mxu0 0.0
        %1130 = vmatmul.mubr.f32.gmra.mrb[0].mxu0 %v1063
        %v1131 = vpop.f32.mrb[0].mxu0
        %v1132 = vadd.f32 0.0, %v1131
        %v1133 = vpop.f32.mrb[0].mxu0
        %1134 = vdwg.mxu0
        %1135 = vrot.lane.b32.xlu0 %v862, 64
        %v1136 = vpop.permute.xlu0 %1135
        %v1139 = vsel %vm1036, %v1058, 0
        %1141 = vmatprep.subr.mxu0 0.0
        %1142 = vmatpush1.msra.mxu0 %v1136
        %1143 = vmatprep.subr.mxu0 0.0
        %1144 = vmatpush1.msra.mxu0 0.0
        %1145 = vmatprep.subr.mxu0 0.0
        %1146 = vmatpush1.msra.mxu0 0.0
        %1147 = vmatprep.subr.mxu0 0.0
        %1148 = vmatpush1.msra.mxu0 0.0
        %1149 = vmatprep.subr.mxu0 0.0
        %1150 = vmatpush1.msra.mxu0 0.0
        %1151 = vmatprep.subr.mxu0 0.0
        %1152 = vmatpush1.msra.mxu0 0.0
        %1153 = vmatprep.subr.mxu0 0.0
        %1154 = vmatpush1.msra.mxu0 0.0
        %1155 = vmatprep.subr.mxu0 0.0
        %1156 = vmatpush1.msra.mxu0 0.0
        %1157 = vmatprep.subr.mxu0 0.0
        %1158 = vmatpush1.msra.mxu0 0.0
        %1159 = vmatprep.subr.mxu0 0.0
        %1160 = vmatpush1.msra.mxu0 0.0
        %1161 = vmatprep.subr.mxu0 0.0
        %1162 = vmatpush1.msra.mxu0 0.0
        %1163 = vmatprep.subr.mxu0 0.0
        %1164 = vmatpush1.msra.mxu0 0.0
        %1165 = vmatprep.subr.mxu0 0.0
        %1166 = vmatpush1.msra.mxu0 0.0
        %1167 = vmatprep.subr.mxu0 0.0
        %1168 = vmatpush1.msra.mxu0 0.0
        %1169 = vmatprep.subr.mxu0 0.0
        %1170 = vmatpush1.msra.mxu0 0.0
        %1171 = vmatprep.subr.mxu0 0.0
        %1172 = vmatpush1.msra.mxu0 0.0
        %1173 = vmatprep.subr.mxu0 0.0
        %1174 = vmatpush1.msra.mxu0 0.0
        %1175 = vmatprep.subr.mxu0 0.0
        %1176 = vmatpush1.msra.mxu0 0.0
        %1177 = vmatprep.subr.mxu0 0.0
        %1178 = vmatpush1.msra.mxu0 0.0
        %1179 = vmatprep.subr.mxu0 0.0
        %1180 = vmatpush1.msra.mxu0 0.0
        %1181 = vmatprep.subr.mxu0 0.0
        %1182 = vmatpush1.msra.mxu0 0.0
        %1183 = vmatprep.subr.mxu0 0.0
        %1184 = vmatpush1.msra.mxu0 0.0
        %1185 = vmatprep.subr.mxu0 0.0
        %1186 = vmatpush1.msra.mxu0 0.0
        %1187 = vmatprep.subr.mxu0 0.0
        %1188 = vmatpush1.msra.mxu0 0.0
        %1189 = vmatprep.subr.mxu0 0.0
        %1190 = vmatpush1.msra.mxu0 0.0
        %1191 = vmatprep.subr.mxu0 0.0
        %1192 = vmatpush1.msra.mxu0 0.0
        %1193 = vmatprep.subr.mxu0 0.0
        %1194 = vmatpush1.msra.mxu0 0.0
        %1195 = vmatprep.subr.mxu0 0.0
        %1196 = vmatpush1.msra.mxu0 0.0
        %1197 = vmatprep.subr.mxu0 0.0
        %1198 = vmatpush1.msra.mxu0 0.0
        %1199 = vmatprep.subr.mxu0 0.0
        %1200 = vmatpush1.msra.mxu0 0.0
        %1201 = vmatprep.subr.mxu0 0.0
        %1202 = vmatpush1.msra.mxu0 0.0
        %1203 = vmatprep.subr.mxu0 0.0
        %1204 = vmatpush1.msra.mxu0 0.0
        %1205 = vmatprep.mubr.f32.mxu0 0.0
        %1206 = vmatmul.mubr.f32.gmra.mrb[0].mxu0 %v1139
        %v1207 = vpop.f32.mrb[0].mxu0
        %v1208 = vadd.f32 0.0, %v1207
        %v1209 = vpop.f32.mrb[0].mxu0
        %1210 = vdwg.mxu0
        %1211 = vrot.lane.b32.xlu0 %v857, 112
        %v1212 = vpop.permute.xlu0 %1211
        %1213 = vrot.lane.b32.xlu0 %v857, 80
        %v1214 = vpop.permute.xlu0 %1213
        %v1215 = vsel %vm868, %v1212, 0
        %v1217 = vsel %vm868, %v1214, 0
        %1219 = vmatprep.subr.mxu0 0.0
        %1220 = vmatpush1.xpose.msra.mxu0 %v1217
        %1221 = vmatprep.subr.mxu0 0.0
        %1222 = vmatpush1.xpose.msra.mxu0 0.0
        %1223 = vmatprep.subr.mxu0 0.0
        %1224 = vmatpush1.xpose.msra.mxu0 0.0
        %1225 = vmatprep.subr.mxu0 0.0
        %1226 = vmatpush1.xpose.msra.mxu0 0.0
        %1227 = vmatprep.subr.mxu0 0.0
        %1228 = vmatpush1.xpose.msra.mxu0 0.0
        %1229 = vmatprep.subr.mxu0 0.0
        %1230 = vmatpush1.xpose.msra.mxu0 0.0
        %1231 = vmatprep.subr.mxu0 0.0
        %1232 = vmatpush1.xpose.msra.mxu0 0.0
        %1233 = vmatprep.subr.mxu0 0.0
        %1234 = vmatpush1.xpose.msra.mxu0 0.0
        %1235 = vmatprep.subr.mxu0 0.0
        %1236 = vmatpush1.xpose.msra.mxu0 0.0
        %1237 = vmatprep.subr.mxu0 0.0
        %1238 = vmatpush1.xpose.msra.mxu0 0.0
        %1239 = vmatprep.subr.mxu0 0.0
        %1240 = vmatpush1.xpose.msra.mxu0 0.0
        %1241 = vmatprep.subr.mxu0 0.0
        %1242 = vmatpush1.xpose.msra.mxu0 0.0
        %1243 = vmatprep.subr.mxu0 0.0
        %1244 = vmatpush1.xpose.msra.mxu0 0.0
        %1245 = vmatprep.subr.mxu0 0.0
        %1246 = vmatpush1.xpose.msra.mxu0 0.0
        %1247 = vmatprep.subr.mxu0 0.0
        %1248 = vmatpush1.xpose.msra.mxu0 0.0
        %1249 = vmatprep.subr.mxu0 0.0
        %1250 = vmatpush1.xpose.msra.mxu0 0.0
        %1251 = vmatprep.subr.mxu0 0.0
        %1252 = vmatpush1.xpose.msra.mxu0 0.0
        %1253 = vmatprep.subr.mxu0 0.0
        %1254 = vmatpush1.xpose.msra.mxu0 0.0
        %1255 = vmatprep.subr.mxu0 0.0
        %1256 = vmatpush1.xpose.msra.mxu0 0.0
        %1257 = vmatprep.subr.mxu0 0.0
        %1258 = vmatpush1.xpose.msra.mxu0 0.0
        %1259 = vmatprep.subr.mxu0 0.0
        %1260 = vmatpush1.xpose.msra.mxu0 0.0
        %1261 = vmatprep.subr.mxu0 0.0
        %1262 = vmatpush1.xpose.msra.mxu0 0.0
        %1263 = vmatprep.subr.mxu0 0.0
        %1264 = vmatpush1.xpose.msra.mxu0 0.0
        %1265 = vmatprep.subr.mxu0 0.0
        %1266 = vmatpush1.xpose.msra.mxu0 0.0
        %1267 = vmatprep.subr.mxu0 0.0
        %1268 = vmatpush1.xpose.msra.mxu0 0.0
        %1269 = vmatprep.subr.mxu0 0.0
        %1270 = vmatpush1.xpose.msra.mxu0 0.0
        %1271 = vmatprep.subr.mxu0 0.0
        %1272 = vmatpush1.xpose.msra.mxu0 0.0
        %1273 = vmatprep.subr.mxu0 0.0
        %1274 = vmatpush1.xpose.msra.mxu0 0.0
        %1275 = vmatprep.subr.mxu0 0.0
        %1276 = vmatpush1.xpose.msra.mxu0 0.0
        %1277 = vmatprep.subr.mxu0 0.0
        %1278 = vmatpush1.xpose.msra.mxu0 0.0
        %1279 = vmatprep.subr.mxu0 0.0
        %1280 = vmatpush1.xpose.msra.mxu0 0.0
        %1281 = vmatprep.subr.mxu0 0.0
        %1282 = vmatpush1.xpose.msra.mxu0 0.0
        %1283 = vmatprep.mubr.f32.mxu0 0.0
        %1284 = vmatmul.mubr.f32.gmra.mrb[0].mxu0 %v1215
        %v1285 = vpop.f32.mrb[0].mxu0
        %v1286 = vadd.f32 0.0, %v1285
        %v1287 = vpop.f32.mrb[0].mxu0
        %1288 = vdwg.mxu0
        %1289 = vrot.lane.b32.xlu0 %v862, 112
        %v1290 = vpop.permute.xlu0 %1289
        %1291 = vrot.lane.b32.xlu0 %v862, 80
        %v1292 = vpop.permute.xlu0 %1291
        %v1293 = vsel %vm868, %v1290, 0
        %v1295 = vsel %vm868, %v1292, 0
        %1297 = vmatprep.subr.mxu0 0.0
        %1298 = vmatpush1.xpose.msra.mxu0 %v1295
        %1299 = vmatprep.subr.mxu0 0.0
        %1300 = vmatpush1.xpose.msra.mxu0 0.0
        %1301 = vmatprep.subr.mxu0 0.0
        %1302 = vmatpush1.xpose.msra.mxu0 0.0
        %1303 = vmatprep.subr.mxu0 0.0
        %1304 = vmatpush1.xpose.msra.mxu0 0.0
        %1305 = vmatprep.subr.mxu0 0.0
        %1306 = vmatpush1.xpose.msra.mxu0 0.0
        %1307 = vmatprep.subr.mxu0 0.0
        %1308 = vmatpush1.xpose.msra.mxu0 0.0
        %1309 = vmatprep.subr.mxu0 0.0
        %1310 = vmatpush1.xpose.msra.mxu0 0.0
        %1311 = vmatprep.subr.mxu0 0.0
        %1312 = vmatpush1.xpose.msra.mxu0 0.0
        %1313 = vmatprep.subr.mxu0 0.0
        %1314 = vmatpush1.xpose.msra.mxu0 0.0
        %1315 = vmatprep.subr.mxu0 0.0
        %1316 = vmatpush1.xpose.msra.mxu0 0.0
        %1317 = vmatprep.subr.mxu0 0.0
        %1318 = vmatpush1.xpose.msra.mxu0 0.0
        %1319 = vmatprep.subr.mxu0 0.0
        %1320 = vmatpush1.xpose.msra.mxu0 0.0
        %1321 = vmatprep.subr.mxu0 0.0
        %1322 = vmatpush1.xpose.msra.mxu0 0.0
        %1323 = vmatprep.subr.mxu0 0.0
        %1324 = vmatpush1.xpose.msra.mxu0 0.0
        %1325 = vmatprep.subr.mxu0 0.0
        %1326 = vmatpush1.xpose.msra.mxu0 0.0
        %1327 = vmatprep.subr.mxu0 0.0
        %1328 = vmatpush1.xpose.msra.mxu0 0.0
        %1329 = vmatprep.subr.mxu0 0.0
        %1330 = vmatpush1.xpose.msra.mxu0 0.0
        %1331 = vmatprep.subr.mxu0 0.0
        %1332 = vmatpush1.xpose.msra.mxu0 0.0
        %1333 = vmatprep.subr.mxu0 0.0
        %1334 = vmatpush1.xpose.msra.mxu0 0.0
        %1335 = vmatprep.subr.mxu0 0.0
        %1336 = vmatpush1.xpose.msra.mxu0 0.0
        %1337 = vmatprep.subr.mxu0 0.0
        %1338 = vmatpush1.xpose.msra.mxu0 0.0
        %1339 = vmatprep.subr.mxu0 0.0
        %1340 = vmatpush1.xpose.msra.mxu0 0.0
        %1341 = vmatprep.subr.mxu0 0.0
        %1342 = vmatpush1.xpose.msra.mxu0 0.0
        %1343 = vmatprep.subr.mxu0 0.0
        %1344 = vmatpush1.xpose.msra.mxu0 0.0
        %1345 = vmatprep.subr.mxu0 0.0
        %1346 = vmatpush1.xpose.msra.mxu0 0.0
        %1347 = vmatprep.subr.mxu0 0.0
        %1348 = vmatpush1.xpose.msra.mxu0 0.0
        %1349 = vmatprep.subr.mxu0 0.0
        %1350 = vmatpush1.xpose.msra.mxu0 0.0
        %1351 = vmatprep.subr.mxu0 0.0
        %1352 = vmatpush1.xpose.msra.mxu0 0.0
        %1353 = vmatprep.subr.mxu0 0.0
        %1354 = vmatpush1.xpose.msra.mxu0 0.0
        %1355 = vmatprep.subr.mxu0 0.0
        %1356 = vmatpush1.xpose.msra.mxu0 0.0
        %1357 = vmatprep.subr.mxu0 0.0
        %1358 = vmatpush1.xpose.msra.mxu0 0.0
        %1359 = vmatprep.subr.mxu0 0.0
        %1360 = vmatpush1.xpose.msra.mxu0 0.0
        %1361 = vmatprep.mubr.f32.mxu0 0.0
        %1362 = vmatmul.mubr.f32.gmra.mrb[0].mxu0 %v1293
        %v1363 = vpop.f32.mrb[0].mxu0
        %v1364 = vadd.f32 0.0, %v1363
        %v1365 = vpop.f32.mrb[0].mxu0
        %1366 = vdwg.mxu0
        %v1367 = vmul.f32 %v1286, 0.25
        %v1368 = vmul.f32 %v1364, 0.25
        %v1369 = vadd.f32 %v1367, %v1027
        %v1370 = vadd.f32 %v1368, %v1031
        %v1371 = vsel %vm1036, %v1369, -inf
        %1372 = vmax.xlane.f32.xlu0 %v1371
        %v1373 = vpop.xlane.xlu0 %1372
        %v1374 = vsel %vm1036, %v1370, -inf
        %1375 = vmax.xlane.f32.xlu0 %v1374
        %v1376 = vpop.xlane.xlu0 %1375
        %v1377 = vsub.f32 %v1369, %v1373
        %v1378 = vsub.f32 %v1370, %v1376
        %v1379 = vmul.f32 %v1377, 1.442695
        %v1380 = vpow.pop %v1379
        %v1381 = vmul.f32 %v1378, 1.442695
        %v1382 = vpow.pop %v1381
        %v1383 = vsel %vm1036, %v1380, 0.0
        %1384 = vadd.xlane.f32.xlu0 %v1383
        %v1385 = vpop.xlane.xlu0 %1384
        %v1386 = vsel %vm1036, %v1382, 0.0
        %1387 = vadd.xlane.f32.xlu0 %v1386
        %v1388 = vpop.xlane.xlu0 %1387
        %v1389 = vrcp.pop %v1385
        %v1390 = vrcp.pop %v1388
        %v1391 = vmul.f32 %v1380, %v1389
        %v1392 = vmul.f32 %v1382, %v1390
        %1393 = vrot.lane.b32.xlu0 %v857, 48
        %v1394 = vpop.permute.xlu0 %1393
        %v1397 = vsel %vm1036, %v1391, 0
        %1399 = vmatprep.subr.mxu0 0.0
        %1400 = vmatpush1.msra.mxu0 %v1394
        %1401 = vmatprep.subr.mxu0 0.0
        %1402 = vmatpush1.msra.mxu0 0.0
        %1403 = vmatprep.subr.mxu0 0.0
        %1404 = vmatpush1.msra.mxu0 0.0
        %1405 = vmatprep.subr.mxu0 0.0
        %1406 = vmatpush1.msra.mxu0 0.0
        %1407 = vmatprep.subr.mxu0 0.0
        %1408 = vmatpush1.msra.mxu0 0.0
        %1409 = vmatprep.subr.mxu0 0.0
        %1410 = vmatpush1.msra.mxu0 0.0
        %1411 = vmatprep.subr.mxu0 0.0
        %1412 = vmatpush1.msra.mxu0 0.0
        %1413 = vmatprep.subr.mxu0 0.0
        %1414 = vmatpush1.msra.mxu0 0.0
        %1415 = vmatprep.subr.mxu0 0.0
        %1416 = vmatpush1.msra.mxu0 0.0
        %1417 = vmatprep.subr.mxu0 0.0
        %1418 = vmatpush1.msra.mxu0 0.0
        %1419 = vmatprep.subr.mxu0 0.0
        %1420 = vmatpush1.msra.mxu0 0.0
        %1421 = vmatprep.subr.mxu0 0.0
        %1422 = vmatpush1.msra.mxu0 0.0
        %1423 = vmatprep.subr.mxu0 0.0
        %1424 = vmatpush1.msra.mxu0 0.0
        %1425 = vmatprep.subr.mxu0 0.0
        %1426 = vmatpush1.msra.mxu0 0.0
        %1427 = vmatprep.subr.mxu0 0.0
        %1428 = vmatpush1.msra.mxu0 0.0
        %1429 = vmatprep.subr.mxu0 0.0
        %1430 = vmatpush1.msra.mxu0 0.0
        %1431 = vmatprep.subr.mxu0 0.0
        %1432 = vmatpush1.msra.mxu0 0.0
        %1433 = vmatprep.subr.mxu0 0.0
        %1434 = vmatpush1.msra.mxu0 0.0
        %1435 = vmatprep.subr.mxu0 0.0
        %1436 = vmatpush1.msra.mxu0 0.0
        %1437 = vmatprep.subr.mxu0 0.0
        %1438 = vmatpush1.msra.mxu0 0.0
        %1439 = vmatprep.subr.mxu0 0.0
        %1440 = vmatpush1.msra.mxu0 0.0
        %1441 = vmatprep.subr.mxu0 0.0
        %1442 = vmatpush1.msra.mxu0 0.0
        %1443 = vmatprep.subr.mxu0 0.0
        %1444 = vmatpush1.msra.mxu0 0.0
        %1445 = vmatprep.subr.mxu0 0.0
        %1446 = vmatpush1.msra.mxu0 0.0
        %1447 = vmatprep.subr.mxu0 0.0
        %1448 = vmatpush1.msra.mxu0 0.0
        %1449 = vmatprep.subr.mxu0 0.0
        %1450 = vmatpush1.msra.mxu0 0.0
        %1451 = vmatprep.subr.mxu0 0.0
        %1452 = vmatpush1.msra.mxu0 0.0
        %1453 = vmatprep.subr.mxu0 0.0
        %1454 = vmatpush1.msra.mxu0 0.0
        %1455 = vmatprep.subr.mxu0 0.0
        %1456 = vmatpush1.msra.mxu0 0.0
        %1457 = vmatprep.subr.mxu0 0.0
        %1458 = vmatpush1.msra.mxu0 0.0
        %1459 = vmatprep.subr.mxu0 0.0
        %1460 = vmatpush1.msra.mxu0 0.0
        %1461 = vmatprep.subr.mxu0 0.0
        %1462 = vmatpush1.msra.mxu0 0.0
        %1463 = vmatprep.mubr.f32.mxu0 0.0
        %1464 = vmatmul.mubr.f32.gmra.mrb[0].mxu0 %v1397
        %v1465 = vpop.f32.mrb[0].mxu0
        %v1466 = vadd.f32 0.0, %v1465
        %v1467 = vpop.f32.mrb[0].mxu0
        %1468 = vdwg.mxu0
        %1469 = vrot.lane.b32.xlu0 %v862, 48
        %v1470 = vpop.permute.xlu0 %1469
        %v1473 = vsel %vm1036, %v1392, 0
        %1475 = vmatprep.subr.mxu0 0.0
        %1476 = vmatpush1.msra.mxu0 %v1470
        %1477 = vmatprep.subr.mxu0 0.0
        %1478 = vmatpush1.msra.mxu0 0.0
        %1479 = vmatprep.subr.mxu0 0.0
        %1480 = vmatpush1.msra.mxu0 0.0
        %1481 = vmatprep.subr.mxu0 0.0
        %1482 = vmatpush1.msra.mxu0 0.0
        %1483 = vmatprep.subr.mxu0 0.0
        %1484 = vmatpush1.msra.mxu0 0.0
        %1485 = vmatprep.subr.mxu0 0.0
        %1486 = vmatpush1.msra.mxu0 0.0
        %1487 = vmatprep.subr.mxu0 0.0
        %1488 = vmatpush1.msra.mxu0 0.0
        %1489 = vmatprep.subr.mxu0 0.0
        %1490 = vmatpush1.msra.mxu0 0.0
        %1491 = vmatprep.subr.mxu0 0.0
        %1492 = vmatpush1.msra.mxu0 0.0
        %1493 = vmatprep.subr.mxu0 0.0
        %1494 = vmatpush1.msra.mxu0 0.0
        %1495 = vmatprep.subr.mxu0 0.0
        %1496 = vmatpush1.msra.mxu0 0.0
        %1497 = vmatprep.subr.mxu0 0.0
        %1498 = vmatpush1.msra.mxu0 0.0
        %1499 = vmatprep.subr.mxu0 0.0
        %1500 = vmatpush1.msra.mxu0 0.0
        %1501 = vmatprep.subr.mxu0 0.0
        %1502 = vmatpush1.msra.mxu0 0.0
        %1503 = vmatprep.subr.mxu0 0.0
        %1504 = vmatpush1.msra.mxu0 0.0
        %1505 = vmatprep.subr.mxu0 0.0
        %1506 = vmatpush1.msra.mxu0 0.0
        %1507 = vmatprep.subr.mxu0 0.0
        %1508 = vmatpush1.msra.mxu0 0.0
        %1509 = vmatprep.subr.mxu0 0.0
        %1510 = vmatpush1.msra.mxu0 0.0
        %1511 = vmatprep.subr.mxu0 0.0
        %1512 = vmatpush1.msra.mxu0 0.0
        %1513 = vmatprep.subr.mxu0 0.0
        %1514 = vmatpush1.msra.mxu0 0.0
        %1515 = vmatprep.subr.mxu0 0.0
        %1516 = vmatpush1.msra.mxu0 0.0
        %1517 = vmatprep.subr.mxu0 0.0
        %1518 = vmatpush1.msra.mxu0 0.0
        %1519 = vmatprep.subr.mxu0 0.0
        %1520 = vmatpush1.msra.mxu0 0.0
        %1521 = vmatprep.subr.mxu0 0.0
        %1522 = vmatpush1.msra.mxu0 0.0
        %1523 = vmatprep.subr.mxu0 0.0
        %1524 = vmatpush1.msra.mxu0 0.0
        %1525 = vmatprep.subr.mxu0 0.0
        %1526 = vmatpush1.msra.mxu0 0.0
        %1527 = vmatprep.subr.mxu0 0.0
        %1528 = vmatpush1.msra.mxu0 0.0
        %1529 = vmatprep.subr.mxu0 0.0
        %1530 = vmatpush1.msra.mxu0 0.0
        %1531 = vmatprep.subr.mxu0 0.0
        %1532 = vmatpush1.msra.mxu0 0.0
        %1533 = vmatprep.subr.mxu0 0.0
        %1534 = vmatpush1.msra.mxu0 0.0
        %1535 = vmatprep.subr.mxu0 0.0
        %1536 = vmatpush1.msra.mxu0 0.0
        %1537 = vmatprep.subr.mxu0 0.0
        %1538 = vmatpush1.msra.mxu0 0.0
        %1539 = vmatprep.mubr.f32.mxu0 0.0
        %1540 = vmatmul.mubr.f32.gmra.mrb[0].mxu0 %v1473
        %v1541 = vpop.f32.mrb[0].mxu0
        %v1542 = vadd.f32 0.0, %v1541
        %v1543 = vpop.f32.mrb[0].mxu0
        %1544 = vdwg.mxu0
        %1547 = vrot.lane.b32.xlu0 %v1466, 16
        %v1548 = vpop.permute.xlu0 %1547
        %1549 = vrot.lane.b32.xlu0 %v1542, 16
        %v1550 = vpop.permute.xlu0 %1549
        %v1553 = vsel %vm868, %v1132, %v1548
        %v1554 = vsel %vm868, %v1208, %v1550
        %v1555 = vld [vmem:[%s727] sm:$0xff]
        %v1556 = vld [vmem:[%s727 + $0x8] sm:$0xff]
        %v1557 = vld [vmem:[%s727 + $0x10] sm:$0xff]
        %v1558 = vld [vmem:[%s727 + $0x18] sm:$0xff]
        %v1559 = vld [vmem:[%s730] sm:$0x1]
        %v1561 = vlaneseq
        %v1562 = vshrl.u32 %v1561, 7
        %v1563 = vsub.s32 0, %v1562
        %v1564 = vrot.slane %v1559, %v1563
        %v1567 = vsel %vm783, %v1553, 0
        %v1570 = vsel %vm783, %v1554, 0
        %1572 = vmatprep.subr.mxu0 0.0
        %1573 = vmatpush1.msra.mxu0 %v1555
        %1574 = vmatprep.subr.mxu0 0.0
        %1575 = vmatpush1.msra.mxu0 %v1556
        %1576 = vmatprep.subr.mxu0 0.0
        %1577 = vmatpush1.msra.mxu0 %v1557
        %1578 = vmatprep.subr.mxu0 0.0
        %1579 = vmatpush1.msra.mxu0 %v1558
        %1580 = vmatprep.subr.mxu0 0.0
        %1581 = vmatpush1.msra.mxu0 0.0
        %1582 = vmatprep.subr.mxu0 0.0
        %1583 = vmatpush1.msra.mxu0 0.0
        %1584 = vmatprep.subr.mxu0 0.0
        %1585 = vmatpush1.msra.mxu0 0.0
        %1586 = vmatprep.subr.mxu0 0.0
        %1587 = vmatpush1.msra.mxu0 0.0
        %1588 = vmatprep.subr.mxu0 0.0
        %1589 = vmatpush1.msra.mxu0 0.0
        %1590 = vmatprep.subr.mxu0 0.0
        %1591 = vmatpush1.msra.mxu0 0.0
        %1592 = vmatprep.subr.mxu0 0.0
        %1593 = vmatpush1.msra.mxu0 0.0
        %1594 = vmatprep.subr.mxu0 0.0
        %1595 = vmatpush1.msra.mxu0 0.0
        %1596 = vmatprep.subr.mxu0 0.0
        %1597 = vmatpush1.msra.mxu0 0.0
        %1598 = vmatprep.subr.mxu0 0.0
        %1599 = vmatpush1.msra.mxu0 0.0
        %1600 = vmatprep.subr.mxu0 0.0
        %1601 = vmatpush1.msra.mxu0 0.0
        %1602 = vmatprep.subr.mxu0 0.0
        %1603 = vmatpush1.msra.mxu0 0.0
        %1604 = vmatprep.subr.mxu0 0.0
        %1605 = vmatpush1.msra.mxu0 0.0
        %1606 = vmatprep.subr.mxu0 0.0
        %1607 = vmatpush1.msra.mxu0 0.0
        %1608 = vmatprep.subr.mxu0 0.0
        %1609 = vmatpush1.msra.mxu0 0.0
        %1610 = vmatprep.subr.mxu0 0.0
        %1611 = vmatpush1.msra.mxu0 0.0
        %1612 = vmatprep.subr.mxu0 0.0
        %1613 = vmatpush1.msra.mxu0 0.0
        %1614 = vmatprep.subr.mxu0 0.0
        %1615 = vmatpush1.msra.mxu0 0.0
        %1616 = vmatprep.subr.mxu0 0.0
        %1617 = vmatpush1.msra.mxu0 0.0
        %1618 = vmatprep.subr.mxu0 0.0
        %1619 = vmatpush1.msra.mxu0 0.0
        %1620 = vmatprep.subr.mxu0 0.0
        %1621 = vmatpush1.msra.mxu0 0.0
        %1622 = vmatprep.subr.mxu0 0.0
        %1623 = vmatpush1.msra.mxu0 0.0
        %1624 = vmatprep.subr.mxu0 0.0
        %1625 = vmatpush1.msra.mxu0 0.0
        %1626 = vmatprep.subr.mxu0 0.0
        %1627 = vmatpush1.msra.mxu0 0.0
        %1628 = vmatprep.subr.mxu0 0.0
        %1629 = vmatpush1.msra.mxu0 0.0
        %1630 = vmatprep.subr.mxu0 0.0
        %1631 = vmatpush1.msra.mxu0 0.0
        %1632 = vmatprep.subr.mxu0 0.0
        %1633 = vmatpush1.msra.mxu0 0.0
        %1634 = vmatprep.subr.mxu0 0.0
        %1635 = vmatpush1.msra.mxu0 0.0
        %1636 = vmatprep.mubr.f32.mxu0 0.0
        %1637 = vmatmul.mubr.f32.gmra.mrb[0].mxu0 %v1567
        %v1638 = vpop.f32.mrb[0].mxu0
        %v1639 = vadd.f32 %v1564, %v1638
        %v1640 = vpop.f32.mrb[0].mxu0
        %1641 = vmatprep.mubr.f32.mxu0 0.0
        %1642 = vmatmul.mubr.f32.gmra.mrb[0].mxu0 %v1570
        %v1643 = vpop.f32.mrb[0].mxu0
        %v1644 = vadd.f32 %v1564, %v1643
        %v1645 = vpop.f32.mrb[0].mxu0
        %1646 = vdwg.mxu0
        %v1647 = vadd.f32 %v768, %v1639
        %v1648 = vadd.f32 %v769, %v1644
        %v1649 = vld [vmem:[%s733] sm:$0x1]
        %v1650 = vld [vmem:[%s736] sm:$0x1]
        %v1651 = vsel %vm783, %v1647, 0.0
        %1652 = vadd.xlane.f32.xlu0 %v1651
        %v1653 = vpop.xlane.xlu0 %1652
        %v1654 = vsel %vm783, %v1648, 0.0
        %1655 = vadd.xlane.f32.xlu0 %v1654
        %v1656 = vpop.xlane.xlu0 %1655
        %v1657 = vrcp.pop 32.0
        %v1658 = vmul.f32 %v1653, %v1657
        %v1659 = vmul.f32 %v1656, %v1657
        %v1660 = vsub.f32 %v1647, %v1658
        %v1661 = vsub.f32 %v1648, %v1659
        %v1662 = vmul.f32 %v1660, %v1660
        %v1663 = vmul.f32 %v1661, %v1661
        %v1664 = vsel %vm783, %v1662, 0.0
        %1665 = vadd.xlane.f32.xlu0 %v1664
        %v1666 = vpop.xlane.xlu0 %1665
        %v1667 = vsel %vm783, %v1663, 0.0
        %1668 = vadd.xlane.f32.xlu0 %v1667
        %v1669 = vpop.xlane.xlu0 %1668
        %v1670 = vmul.f32 %v1666, %v1657
        %v1671 = vmul.f32 %v1669, %v1657
        %v1672 = vadd.f32 %v1670, 1e-05
        %v1673 = vadd.f32 %v1671, 1e-05
        %v1674 = vrsqrt.pop %v1672
        %v1675 = vrsqrt.pop %v1673
        %v1676 = vmul.f32 %v1660, %v1674
        %v1677 = vmul.f32 %v1661, %v1675
        %v1679 = vlaneseq
        %v1680 = vshrl.u32 %v1679, 7
        %v1681 = vsub.s32 0, %v1680
        %v1682 = vrot.slane %v1649, %v1681
        %v1684 = vmul.f32 %v1676, %v1682
        %v1685 = vmul.f32 %v1677, %v1682
        %v1687 = vlaneseq
        %v1688 = vshrl.u32 %v1687, 7
        %v1689 = vsub.s32 0, %v1688
        %v1690 = vrot.slane %v1650, %v1689
        %v1692 = vadd.f32 %v1684, %v1690
        %v1693 = vadd.f32 %v1685, %v1690
        %v1694 = vld [vmem:[%s741] sm:$0xff]
        %v1695 = vld [vmem:[%s741 + $0x8] sm:$0xff]
        %v1696 = vld [vmem:[%s741 + $0x10] sm:$0xff]
        %v1697 = vld [vmem:[%s741 + $0x18] sm:$0xff]
        %v1698 = vld [vmem:[%s744] sm:$0x1]
        %v1700 = vlaneseq
        %v1701 = vshrl.u32 %v1700, 7
        %v1702 = vsub.s32 0, %v1701
        %v1703 = vrot.slane %v1698, %v1702
        %v1706 = vsel %vm783, %v1692, 0
        %v1709 = vsel %vm783, %v1693, 0
        %1711 = vmatprep.subr.mxu0 0.0
        %1712 = vmatpush1.msra.mxu0 %v1694
        %1713 = vmatprep.subr.mxu0 0.0
        %1714 = vmatpush1.msra.mxu0 %v1695
        %1715 = vmatprep.subr.mxu0 0.0
        %1716 = vmatpush1.msra.mxu0 %v1696
        %1717 = vmatprep.subr.mxu0 0.0
        %1718 = vmatpush1.msra.mxu0 %v1697
        %1719 = vmatprep.subr.mxu0 0.0
        %1720 = vmatpush1.msra.mxu0 0.0
        %1721 = vmatprep.subr.mxu0 0.0
        %1722 = vmatpush1.msra.mxu0 0.0
        %1723 = vmatprep.subr.mxu0 0.0
        %1724 = vmatpush1.msra.mxu0 0.0
        %1725 = vmatprep.subr.mxu0 0.0
        %1726 = vmatpush1.msra.mxu0 0.0
        %1727 = vmatprep.subr.mxu0 0.0
        %1728 = vmatpush1.msra.mxu0 0.0
        %1729 = vmatprep.subr.mxu0 0.0
        %1730 = vmatpush1.msra.mxu0 0.0
        %1731 = vmatprep.subr.mxu0 0.0
        %1732 = vmatpush1.msra.mxu0 0.0
        %1733 = vmatprep.subr.mxu0 0.0
        %1734 = vmatpush1.msra.mxu0 0.0
        %1735 = vmatprep.subr.mxu0 0.0
        %1736 = vmatpush1.msra.mxu0 0.0
        %1737 = vmatprep.subr.mxu0 0.0
        %1738 = vmatpush1.msra.mxu0 0.0
        %1739 = vmatprep.subr.mxu0 0.0
        %1740 = vmatpush1.msra.mxu0 0.0
        %1741 = vmatprep.subr.mxu0 0.0
        %1742 = vmatpush1.msra.mxu0 0.0
        %1743 = vmatprep.subr.mxu0 0.0
        %1744 = vmatpush1.msra.mxu0 0.0
        %1745 = vmatprep.subr.mxu0 0.0
        %1746 = vmatpush1.msra.mxu0 0.0
        %1747 = vmatprep.subr.mxu0 0.0
        %1748 = vmatpush1.msra.mxu0 0.0
        %1749 = vmatprep.subr.mxu0 0.0
        %1750 = vmatpush1.msra.mxu0 0.0
        %1751 = vmatprep.subr.mxu0 0.0
        %1752 = vmatpush1.msra.mxu0 0.0
        %1753 = vmatprep.subr.mxu0 0.0
        %1754 = vmatpush1.msra.mxu0 0.0
        %1755 = vmatprep.subr.mxu0 0.0
        %1756 = vmatpush1.msra.mxu0 0.0
        %1757 = vmatprep.subr.mxu0 0.0
        %1758 = vmatpush1.msra.mxu0 0.0
        %1759 = vmatprep.subr.mxu0 0.0
        %1760 = vmatpush1.msra.mxu0 0.0
        %1761 = vmatprep.subr.mxu0 0.0
        %1762 = vmatpush1.msra.mxu0 0.0
        %1763 = vmatprep.subr.mxu0 0.0
        %1764 = vmatpush1.msra.mxu0 0.0
        %1765 = vmatprep.subr.mxu0 0.0
        %1766 = vmatpush1.msra.mxu0 0.0
        %1767 = vmatprep.subr.mxu0 0.0
        %1768 = vmatpush1.msra.mxu0 0.0
        %1769 = vmatprep.subr.mxu0 0.0
        %1770 = vmatpush1.msra.mxu0 0.0
        %1771 = vmatprep.subr.mxu0 0.0
        %1772 = vmatpush1.msra.mxu0 0.0
        %1773 = vmatprep.subr.mxu0 0.0
        %1774 = vmatpush1.msra.mxu0 0.0
        %1775 = vmatprep.mubr.f32.mxu0 0.0
        %1776 = vmatmul.mubr.f32.gmra.mrb[0].mxu0 %v1706
        %v1777 = vpop.f32.mrb[0].mxu0
        %v1778 = vadd.f32 %v1703, %v1777
        %v1779 = vpop.f32.mrb[0].mxu0
        %1780 = vmatprep.mubr.f32.mxu0 0.0
        %1781 = vmatmul.mubr.f32.gmra.mrb[0].mxu0 %v1709
        %v1782 = vpop.f32.mrb[0].mxu0
        %v1783 = vadd.f32 %v1703, %v1782
        %v1784 = vpop.f32.mrb[0].mxu0
        %1785 = vdwg.mxu0
        %v1786 = vmul.f32 %v1778, %v1778
        %v1787 = vmul.f32 %v1783, %v1783
        %v1788 = vmul.f32 %v1778, %v1786
        %v1789 = vmul.f32 %v1783, %v1787
        %v1790 = vmul.f32 %v1788, 0.044715
        %v1791 = vmul.f32 %v1789, 0.044715
        %v1792 = vadd.f32 %v1778, %v1790
        %v1793 = vadd.f32 %v1783, %v1791
        %v1794 = vmul.f32 %v1792, 0.7978846
        %v1795 = vmul.f32 %v1793, 0.7978846
        %v1796 = vtanh.pop %v1794
        %v1797 = vtanh.pop %v1795
        %v1798 = vadd.f32 %v1796, 1.0
        %v1799 = vadd.f32 %v1797, 1.0
        %v1800 = vmul.f32 %v1798, 0.5
        %v1801 = vmul.f32 %v1799, 0.5
        %v1802 = vmul.f32 %v1778, %v1800
        %v1803 = vmul.f32 %v1783, %v1801
        %v1804 = vld [vmem:[%s749] sm:$0xff]
        %v1805 = vld [vmem:[%s749 + $0x8] sm:$0xff]
        %v1806 = vld [vmem:[%s749 + $0x10] sm:$0xff]
        %v1807 = vld [vmem:[%s749 + $0x18] sm:$0xff]
        %v1808 = vld [vmem:[%s749 + $0x20] sm:$0xff]
        %v1809 = vld [vmem:[%s749 + $0x28] sm:$0xff]
        %v1810 = vld [vmem:[%s749 + $0x30] sm:$0xff]
        %v1811 = vld [vmem:[%s749 + $0x38] sm:$0xff]
        %v1812 = vld [vmem:[%s752] sm:$0x1]
        %v1814 = vlaneseq
        %v1815 = vshrl.u32 %v1814, 7
        %v1816 = vsub.s32 0, %v1815
        %v1817 = vrot.slane %v1812, %v1816
        %vm1819 = vcmask 523264
        %v1821 = vsel %vm1819, %v1802, 0
        %v1824 = vsel %vm1819, %v1803, 0
        %1826 = vmatprep.subr.mxu0 0.0
        %1827 = vmatpush1.msra.mxu0 %v1804
        %1828 = vmatprep.subr.mxu0 0.0
        %1829 = vmatpush1.msra.mxu0 %v1805
        %1830 = vmatprep.subr.mxu0 0.0
        %1831 = vmatpush1.msra.mxu0 %v1806
        %1832 = vmatprep.subr.mxu0 0.0
        %1833 = vmatpush1.msra.mxu0 %v1807
        %1834 = vmatprep.subr.mxu0 0.0
        %1835 = vmatpush1.msra.mxu0 %v1808
        %1836 = vmatprep.subr.mxu0 0.0
        %1837 = vmatpush1.msra.mxu0 %v1809
        %1838 = vmatprep.subr.mxu0 0.0
        %1839 = vmatpush1.msra.mxu0 %v1810
        %1840 = vmatprep.subr.mxu0 0.0
        %1841 = vmatpush1.msra.mxu0 %v1811
        %1842 = vmatprep.subr.mxu0 0.0
        %1843 = vmatpush1.msra.mxu0 0.0
        %1844 = vmatprep.subr.mxu0 0.0
        %1845 = vmatpush1.msra.mxu0 0.0
        %1846 = vmatprep.subr.mxu0 0.0
        %1847 = vmatpush1.msra.mxu0 0.0
        %1848 = vmatprep.subr.mxu0 0.0
        %1849 = vmatpush1.msra.mxu0 0.0
        %1850 = vmatprep.subr.mxu0 0.0
        %1851 = vmatpush1.msra.mxu0 0.0
        %1852 = vmatprep.subr.mxu0 0.0
        %1853 = vmatpush1.msra.mxu0 0.0
        %1854 = vmatprep.subr.mxu0 0.0
        %1855 = vmatpush1.msra.mxu0 0.0
        %1856 = vmatprep.subr.mxu0 0.0
        %1857 = vmatpush1.msra.mxu0 0.0
        %1858 = vmatprep.subr.mxu0 0.0
        %1859 = vmatpush1.msra.mxu0 0.0
        %1860 = vmatprep.subr.mxu0 0.0
        %1861 = vmatpush1.msra.mxu0 0.0
        %1862 = vmatprep.subr.mxu0 0.0
        %1863 = vmatpush1.msra.mxu0 0.0
        %1864 = vmatprep.subr.mxu0 0.0
        %1865 = vmatpush1.msra.mxu0 0.0
        %1866 = vmatprep.subr.mxu0 0.0
        %1867 = vmatpush1.msra.mxu0 0.0
        %1868 = vmatprep.subr.mxu0 0.0
        %1869 = vmatpush1.msra.mxu0 0.0
        %1870 = vmatprep.subr.mxu0 0.0
        %1871 = vmatpush1.msra.mxu0 0.0
        %1872 = vmatprep.subr.mxu0 0.0
        %1873 = vmatpush1.msra.mxu0 0.0
        %1874 = vmatprep.subr.mxu0 0.0
        %1875 = vmatpush1.msra.mxu0 0.0
        %1876 = vmatprep.subr.mxu0 0.0
        %1877 = vmatpush1.msra.mxu0 0.0
        %1878 = vmatprep.subr.mxu0 0.0
        %1879 = vmatpush1.msra.mxu0 0.0
        %1880 = vmatprep.subr.mxu0 0.0
        %1881 = vmatpush1.msra.mxu0 0.0
        %1882 = vmatprep.subr.mxu0 0.0
        %1883 = vmatpush1.msra.mxu0 0.0
        %1884 = vmatprep.subr.mxu0 0.0
        %1885 = vmatpush1.msra.mxu0 0.0
        %1886 = vmatprep.subr.mxu0 0.0
        %1887 = vmatpush1.msra.mxu0 0.0
        %1888 = vmatprep.subr.mxu0 0.0
        %1889 = vmatpush1.msra.mxu0 0.0
        %1890 = vmatprep.mubr.f32.mxu0 0.0
        %1891 = vmatmul.mubr.f32.gmra.mrb[0].mxu0 %v1821
        %v1892 = vpop.f32.mrb[0].mxu0
        %v1893 = vadd.f32 %v1817, %v1892
        %v1894 = vpop.f32.mrb[0].mxu0
        %1895 = vmatprep.mubr.f32.mxu0 0.0
        %1896 = vmatmul.mubr.f32.gmra.mrb[0].mxu0 %v1824
        %v1897 = vpop.f32.mrb[0].mxu0
        %v1898 = vadd.f32 %v1817, %v1897
        %v1899 = vpop.f32.mrb[0].mxu0
        %1900 = vdwg.mxu0
        %v1901 = vadd.f32 %v1692, %v1893
        %v1902 = vadd.f32 %v1693, %v1898
        %v1903 = vld [vmem:[%s755] sm:$0x1]
        %v1904 = vld [vmem:[%s758] sm:$0x1]
        %v1905 = vsel %vm783, %v1901, 0.0
        %1906 = vadd.xlane.f32.xlu0 %v1905
        %v1907 = vpop.xlane.xlu0 %1906
        %v1908 = vsel %vm783, %v1902, 0.0
        %1909 = vadd.xlane.f32.xlu0 %v1908
        %v1910 = vpop.xlane.xlu0 %1909
        %v1911 = vmul.f32 %v1907, %v1657
        %v1912 = vmul.f32 %v1910, %v1657
        %v1913 = vsub.f32 %v1901, %v1911
        %v1914 = vsub.f32 %v1902, %v1912
        %v1915 = vmul.f32 %v1913, %v1913
        %v1916 = vmul.f32 %v1914, %v1914
        %v1917 = vsel %vm783, %v1915, 0.0
        %1918 = vadd.xlane.f32.xlu0 %v1917
        %v1919 = vpop.xlane.xlu0 %1918
        %v1920 = vsel %vm783, %v1916, 0.0
        %1921 = vadd.xlane.f32.xlu0 %v1920
        %v1922 = vpop.xlane.xlu0 %1921
        %v1923 = vmul.f32 %v1919, %v1657
        %v1924 = vmul.f32 %v1922, %v1657
        %v1925 = vadd.f32 %v1923, 1e-05
        %v1926 = vadd.f32 %v1924, 1e-05
        %v1927 = vrsqrt.pop %v1925
        %v1928 = vrsqrt.pop %v1926
        %v1929 = vmul.f32 %v1913, %v1927
        %v1930 = vmul.f32 %v1914, %v1928
        %v1932 = vlaneseq
        %v1933 = vshrl.u32 %v1932, 7
        %v1934 = vsub.s32 0, %v1933
        %v1935 = vrot.slane %v1903, %v1934
        %v1937 = vmul.f32 %v1929, %v1935
        %v1938 = vmul.f32 %v1930, %v1935
        %v1940 = vlaneseq
        %v1941 = vshrl.u32 %v1940, 7
        %v1942 = vsub.s32 0, %v1941
        %v1943 = vrot.slane %v1904, %v1942
        %v1945 = vadd.f32 %v1937, %v1943
        %v1946 = vadd.f32 %v1938, %v1943
        %1947 = vst.msk [vmem:[#allocation2] sm:$0xff] %vm783, %v1945
        %1948 = vst.msk [vmem:[#allocation2 + $0x8] sm:$0xff] %vm783, %v1946
        %p1949 = scmp.eq.s32.totalorder %s32, 1
        // Predicated region
        $region97: #{forward.1} parent=91 // pred_check
          %p1950 = pneg %p1949
        $region98: #{forward.1} parent=91 // pred_check_branch
          %1952 = sbr.rel (%p1950) target = $region100
        $region99: #{forward.1} parent=91 // pred_region
          %v1953 = vld [vmem:[%s16] sm:$0xff]
          %v1954 = vld [vmem:[%s16 + $0x8] sm:$0xff]
          %v1955 = vld [vmem:[%s16 + $0x10] sm:$0xff]
          %v1956 = vld [vmem:[%s16 + $0x18] sm:$0xff]
          %v1957 = vld [vmem:[%s17] sm:$0x1]
          %v1959 = vlaneseq
          %v1960 = vshrl.u32 %v1959, 7
          %v1961 = vsub.s32 0, %v1960
          %v1962 = vrot.slane %v1957, %v1961
          %v1965 = vsel %vm783, %v1945, 0
          %v1968 = vsel %vm783, %v1946, 0
          %1970 = vmatprep.subr.mxu0 0.0
          %1971 = vmatpush1.msra.mxu0 %v1953
          %1972 = vmatprep.subr.mxu0 0.0
          %1973 = vmatpush1.msra.mxu0 %v1954
          %1974 = vmatprep.subr.mxu0 0.0
          %1975 = vmatpush1.msra.mxu0 %v1955
          %1976 = vmatprep.subr.mxu0 0.0
          %1977 = vmatpush1.msra.mxu0 %v1956
          %1978 = vmatprep.subr.mxu0 0.0
          %1979 = vmatpush1.msra.mxu0 0.0
          %1980 = vmatprep.subr.mxu0 0.0
          %1981 = vmatpush1.msra.mxu0 0.0
          %1982 = vmatprep.subr.mxu0 0.0
          %1983 = vmatpush1.msra.mxu0 0.0
          %1984 = vmatprep.subr.mxu0 0.0
          %1985 = vmatpush1.msra.mxu0 0.0
          %1986 = vmatprep.subr.mxu0 0.0
          %1987 = vmatpush1.msra.mxu0 0.0
          %1988 = vmatprep.subr.mxu0 0.0
          %1989 = vmatpush1.msra.mxu0 0.0
          %1990 = vmatprep.subr.mxu0 0.0
          %1991 = vmatpush1.msra.mxu0 0.0
          %1992 = vmatprep.subr.mxu0 0.0
          %1993 = vmatpush1.msra.mxu0 0.0
          %1994 = vmatprep.subr.mxu0 0.0
          %1995 = vmatpush1.msra.mxu0 0.0
          %1996 = vmatprep.subr.mxu0 0.0
          %1997 = vmatpush1.msra.mxu0 0.0
          %1998 = vmatprep.subr.mxu0 0.0
          %1999 = vmatpush1.msra.mxu0 0.0
          %2000 = vmatprep.subr.mxu0 0.0
          %2001 = vmatpush1.msra.mxu0 0.0
          %2002 = vmatprep.subr.mxu0 0.0
          %2003 = vmatpush1.msra.mxu0 0.0
          %2004 = vmatprep.subr.mxu0 0.0
          %2005 = vmatpush1.msra.mxu0 0.0
          %2006 = vmatprep.subr.mxu0 0.0
          %2007 = vmatpush1.msra.mxu0 0.0
          %2008 = vmatprep.subr.mxu0 0.0
          %2009 = vmatpush1.msra.mxu0 0.0
          %2010 = vmatprep.subr.mxu0 0.0
          %2011 = vmatpush1.msra.mxu0 0.0
          %2012 = vmatprep.subr.mxu0 0.0
          %2013 = vmatpush1.msra.mxu0 0.0
          %2014 = vmatprep.subr.mxu0 0.0
          %2015 = vmatpush1.msra.mxu0 0.0
          %2016 = vmatprep.subr.mxu0 0.0
          %2017 = vmatpush1.msra.mxu0 0.0
          %2018 = vmatprep.subr.mxu0 0.0
          %2019 = vmatpush1.msra.mxu0 0.0
          %2020 = vmatprep.subr.mxu0 0.0
          %2021 = vmatpush1.msra.mxu0 0.0
          %2022 = vmatprep.subr.mxu0 0.0
          %2023 = vmatpush1.msra.mxu0 0.0
          %2024 = vmatprep.subr.mxu0 0.0
          %2025 = vmatpush1.msra.mxu0 0.0
          %2026 = vmatprep.subr.mxu0 0.0
          %2027 = vmatpush1.msra.mxu0 0.0
          %2028 = vmatprep.subr.mxu0 0.0
          %2029 = vmatpush1.msra.mxu0 0.0
          %2030 = vmatprep.subr.mxu0 0.0
          %2031 = vmatpush1.msra.mxu0 0.0
          %2032 = vmatprep.subr.mxu0 0.0
          %2033 = vmatpush1.msra.mxu0 0.0
          %2034 = vmatprep.mubr.f32.mxu0 0.0
          %2035 = vmatmul.mubr.f32.gmra.mrb[0].mxu0 %v1965
          %v2036 = vpop.f32.mrb[0].mxu0
          %v2037 = vadd.f32 %v1962, %v2036
          %v2038 = vpop.f32.mrb[0].mxu0
          %2039 = vmatprep.mubr.f32.mxu0 0.0
          %2040 = vmatmul.mubr.f32.gmra.mrb[0].mxu0 %v1968
          %v2041 = vpop.f32.mrb[0].mxu0
          %v2042 = vadd.f32 %v1962, %v2041
          %v2043 = vpop.f32.mrb[0].mxu0
          %2044 = vdwg.mxu0
          %2045 = vst [vmem:[%s19] sm:$0xff] %v2037
          %2046 = vst [vmem:[%s19 + $0x8] sm:$0xff] %v2042
          %v2047 = vlaneseq
          %v2048 = vand.u32 %v2047, 127
          %vm2049 = vcmp.lt.s32.totalorder %v2048, 5
          %v2050 = vsel %vm2049, %v2037, -1e+09
          %v2051 = vsel %vm2049, %v2042, -1e+09
          %2052 = vmax.xlane.f32.xlu0 %v2050
          %v2053 = vpop.xlane.xlu0 %2052
          %2054 = vmax.xlane.f32.xlu0 %v2051
          %v2055 = vpop.xlane.xlu0 %2054
          %v2056 = vsub.f32 %v2050, %v2053
          %v2057 = vsub.f32 %v2051, %v2055
          %v2058 = vmul.f32 %v2056, 1.442695
          %v2059 = vpow.pop %v2058
          %v2060 = vmul.f32 %v2057, 1.442695
          %v2061 = vpow.pop %v2060
          %2062 = vadd.xlane.f32.xlu0 %v2059
          %v2063 = vpop.xlane.xlu0 %2062
          %2064 = vadd.xlane.f32.xlu0 %v2061
          %v2065 = vpop.xlane.xlu0 %2064
          %v2066 = vlog2.pop %v2063
          %v2067 = vmul.f32 %v2066, 0.6931472
          %v2068 = vlog2.pop %v2065
          %v2069 = vmul.f32 %v2068, 0.6931472
          %v2070 = vadd.f32 %v2067, %v2053
          %v2071 = vadd.f32 %v2069, %v2055
          %v2072 = vld [vmem:[%s3] sm:$0xff]
          %v2073 = vld [vmem:[%s3 + $0x8] sm:$0xff]
          %2074 = vset.pattern.permute.xlu0 0
          %2075 = vperm.xlu0 %2074, %v2072
          %v2076 = vpop.permute.xlu0 %2075
          %2077 = vset.pattern.permute.xlu0 0
          %2078 = vperm.xlu0 %2077, %v2073
          %v2079 = vpop.permute.xlu0 %2078
          %vm2080 = vcmp.eq.s32.totalorder %v2048, %v2076
          %vm2081 = vcmp.eq.s32.totalorder %v2048, %v2079
          %v2082 = vsel %vm2080, 1, 0
          %v2083 = vsel %vm2081, 1, 0
          %v2084 = vcvt.s32.f32 %v2082
          %v2085 = vcvt.s32.f32 %v2083
          %v2086 = vmul.f32 %v2050, %v2084
          %v2087 = vmul.f32 %v2051, %v2085
          %2088 = vadd.xlane.f32.xlu0 %v2086
          %v2089 = vpop.xlane.xlu0 %2088
          %2090 = vadd.xlane.f32.xlu0 %v2087
          %v2091 = vpop.xlane.xlu0 %2090
          %v2092 = vsub.f32 %v2070, %v2089
          %v2093 = vsub.f32 %v2071, %v2091
          %v2094 = vld [vmem:[%s2] sm:$0xff]
          %v2095 = vld [vmem:[%s2 + $0x8] sm:$0xff]
          %v2096 = vmul.f32 %v2092, %v2094
          %v2097 = vmul.f32 %v2093, %v2095
          %vm2098 = vcmask 7168
          %v2099 = vsel %vm2098, %v2096, 0.0
          %v2100 = vsel %vm2098, %v2097, 0.0
          %v2101 = vadd.f32 %v2099, %v2100
          %2102 = vadd.xlane.f32.xlu0 %v2101
          %v2103 = vpop.xlane.xlu0 %2102
          %v2104 = vrot.slane %v2103, 4
          %v2105 = vadd.f32 %v2103, %v2104
          %v2106 = vrot.slane %v2105, 2
          %v2107 = vadd.f32 %v2105, %v2106
          %v2108 = vrot.slane %v2107, 1
          %v2109 = vadd.f32 %v2107, %v2108
          %s2110 = vtos %v2109
          %v2111 = vsel %vm2098, %v2094, 0.0
          %v2112 = vsel %vm2098, %v2095, 0.0
          %v2113 = vadd.f32 %v2111, %v2112
          %2114 = vadd.xlane.f32.xlu0 %v2113
          %v2115 = vpop.xlane.xlu0 %2114
          %v2116 = vrot.slane %v2115, 4
          %v2117 = vadd.f32 %v2115, %v2116
          %v2118 = vrot.slane %v2117, 2
          %v2119 = vadd.f32 %v2117, %v2118
          %v2120 = vrot.slane %v2119, 1
          %v2121 = vadd.f32 %v2119, %v2120
          %s2122 = vtos %v2121
          %s2123 = smax.f32 %s2122, 1.0
          %v2124 = vstv %s2123
          %v2125 = vrcp.pop %v2124
          %s2126 = vtos %v2125
          %s2127 = smul.f32 %s2110, %s2126
          %s2128 = scalar_lea.smem [#allocation3], 0
          %2129 = sst [smem:[%s2128]] %s2127
        $region100: #{forward.1} parent=91 // pred_fallthru
          _
        // Predicated region
        $region101: #{forward.1} parent=91 // pred_check
          %p2130 = pneg %p483
        $region102: #{forward.1} parent=91 // pred_check_branch
          %2132 = sbr.rel (%p2130) target = $region104
        $region103: #{forward.1} parent=91 // pred_region
          %s2134 = ssub.s32 16, 16
          %2135 = vsyncadd [#allocation4], %s2134
          %2138 = dma.smem_to_hbm [#allocation3], 16, %s18, [#allocation4]
        $region104: #{forward.1} parent=91 // pred_fallthru
          _
        // Predicated region
        $region105: #{forward.1} parent=91 // pred_check
          %p2139 = pneg %p504
        $region106: #{forward.1} parent=91 // pred_check_branch
          %2141 = sbr.rel (%p2139) target = $region108
        $region107: #{forward.1} parent=91 // pred_region
          _
        $region108: #{forward.1} parent=91 // pred_fallthru
          _
        // Predicated region
        $region109: #{forward.1} parent=91 // pred_check
          %p2142 = pneg %p483
        $region110: #{forward.1} parent=91 // pred_check_branch
          %2144 = sbr.rel (%p2142) target = $region112
        $region111: #{forward.1} parent=91 // pred_region
          %2145 = dma.done [#allocation4], 16
        $region112: #{forward.1} parent=91 // pred_fallthru
          _
        // Predicated region
        $region113: #{forward.1} parent=91 // pred_check
          %p2146 = pneg %p504
        $region114: #{forward.1} parent=91 // pred_check_branch
          %2148 = sbr.rel (%p2146) target = $region116
        $region115: #{forward.1} parent=91 // pred_region
          _
        $region116: #{forward.1} parent=91 // pred_fallthru
          _
        %2149 = sfence
      $region92: #{forward.1} parent=5 // pred_fallthru
        _
      %p2150 = scmp.le.s32.totalorder 2, %s27
      // Predicated region
      $region117: #{forward.1} parent=5 // pred_check
        %p2151 = pneg %p2150
      $region118: #{forward.1} parent=5 // pred_check_branch
        %2153 = sbr.rel (%p2151) target = $region120
      $region119: #{forward.1} parent=5 // pred_region
        %s2154 = ssub.s32 %s27, 2
      $region120: #{forward.1} parent=5 // pred_fallthru
        _
    $region6: #{forward.1} parent=1 // loop_footer
      %s31 = sadd.s32 1, %s27
    $region7: #{forward.1} parent=1 // loop_footer_branch
      %26 = sbr.rel target = $region3
    $region8: #{forward.1} parent=1 // loop_exit
      _
    %2155 = vsyncpa [#allocation4], 1
    %s2156 = scalar_lea.sflag [#allocation4], 1
    %2157 = vsyncpa %s2156, 1

</llo_original>
